<compile_context>
chip_gen: v7x
topology: tpu7x:2x2x1
jax: 0.10.0
libtpu: 0.0.40
codegen_flags: <defaults>
</compile_context>

<pallas_src>
import jax
import jax.numpy as jnp
from jax import lax
from jax.experimental import pallas as pl
from jax.experimental.pallas import tpu as pltpu

D_MODEL = 32
D_FF = 64
N_HEADS = 4
HEAD_DIM = D_MODEL // N_HEADS
LN_EPS = 1e-5

# Rows of the packed per-encoder scalar slab (each row padded to 128 lanes, f32).
_ROW_BQKV, _ROW_BO, _ROW_B1, _ROW_B2 = 0, 1, 2, 3
_ROW_G1, _ROW_BE1, _ROW_G2, _ROW_BE2, _ROW_GF, _ROW_BEF = 4, 5, 6, 7, 8, 9
_N_VEC_ROWS = 10
_VEC_WIDTH = 128


def _layernorm(x, gamma, beta):
    # PyTorch nn.LayerNorm: biased variance over last dim, eps=1e-5, affine.
    # Two-pass (x - mu) variance for numerical parity with the reference.
    mu = jnp.mean(x, axis=-1, keepdims=True)
    d = x - mu
    var = jnp.mean(d * d, axis=-1, keepdims=True)
    return d * lax.rsqrt(var + LN_EPS) * gamma + beta


def _encoder_body(x, qkv, wa, w2, vec):
    """One Informer Encoder (EncoderLayer + final LayerNorm).

    x   : (Lk, D)   f32 residual-stream input
    qkv : (Lk, 3D)  f32, x @ [Wq*scale | Wk | Wv]   (bias not yet added)
    wa  : (D, D+F)  bf16, [Wo | W1]
    w2  : (F, D)    bf16
    vec : (10, 128) f32 packed biases / LayerNorm params
    """
    Lk, D = x.shape
    F = D_FF
    H, Dh = N_HEADS, HEAD_DIM

    w_o = wa[:, :D]
    w_1 = wa[:, D:D + F]

    b_qkv = vec[_ROW_BQKV:_ROW_BQKV + 1, :3 * D]
    b_o = vec[_ROW_BO:_ROW_BO + 1, :D]
    b_1 = vec[_ROW_B1:_ROW_B1 + 1, :F]
    b_2 = vec[_ROW_B2:_ROW_B2 + 1, :D]
    g1, be1 = vec[_ROW_G1:_ROW_G1 + 1, :D], vec[_ROW_BE1:_ROW_BE1 + 1, :D]
    g2, be2 = vec[_ROW_G2:_ROW_G2 + 1, :D], vec[_ROW_BE2:_ROW_BE2 + 1, :D]
    gf, bef = vec[_ROW_GF:_ROW_GF + 1, :D], vec[_ROW_BEF:_ROW_BEF + 1, :D]

    # Single bf16 cast of the whole QKV block (scale already folded into Q cols).
    qkvb = (qkv + b_qkv).astype(jnp.bfloat16)

    # --- FullAttention.  Heads live in static lane slices (head-major packed
    # weight columns), so no transpose / reshape is emitted.  Output projection
    # is applied per head and summed (== concat(heads) @ Wo).
    attn = None
    for h in range(H):
        q_h = qkvb[:, h * Dh:(h + 1) * Dh]                    # (Lk, Dh)
        k_h = qkvb[:, D + h * Dh:D + (h + 1) * Dh]            # (Lk, Dh)
        v_h = qkvb[:, 2 * D + h * Dh:2 * D + (h + 1) * Dh]    # (Lk, Dh)

        # scores: contract the Dh axis of both operands (no explicit transpose)
        s = lax.dot_general(q_h, k_h, (((1,), (1,)), ((), ())),
                            preferred_element_type=jnp.float32)   # (Lk, Lk)
        m = jnp.max(s, axis=-1, keepdims=True)
        e = jnp.exp(s - m)
        p = e * pl.reciprocal(jnp.sum(e, axis=-1, keepdims=True), approx=True)
        o_h = jnp.dot(p.astype(jnp.bfloat16), v_h,
                      preferred_element_type=jnp.float32)         # (Lk, Dh)
        part = jnp.dot(o_h.astype(jnp.bfloat16), w_o[h * Dh:(h + 1) * Dh, :],
                       preferred_element_type=jnp.float32)        # (Lk, D)
        attn = part if attn is None else attn + part
    attn = attn + b_o

    # residual + norm1 (dropout = identity in eval mode)
    x1 = _layernorm(x + attn, g1, be1)

    # FFN: Conv1d(k=1) -> ReLU -> Conv1d(k=1)  == pointwise matmuls
    y = jnp.dot(x1.astype(jnp.bfloat16), w_1, preferred_element_type=jnp.float32) + b_1
    y = jnp.maximum(y, 0.0)
    y = jnp.dot(y.astype(jnp.bfloat16), w2, preferred_element_type=jnp.float32) + b_2

    x2 = _layernorm(x1 + y, g2, be2)     # norm2
    return _layernorm(x2, gf, bef)       # Encoder's final LayerNorm


def _stack_kernel(x_ref, wqkv_ref, wa0_ref, w20_ref, vec0_ref,
                  wa2_ref, w22_ref, vec2_ref, o_ref):
    """Fused EncoderStack forward for ONE batch row (grid over batch).

    Encoder 0 runs on the full sequence; encoder 2 on the last L//4 positions,
    sliced directly from the VMEM-resident block.  Encoder 1's output is never
    used by the reference forward, so it is skipped.
    """
    x = x_ref[...]                          # (L, D) f32
    L, D = x.shape
    Lt = L // 4                             # inp_lens == (0, 1, 2)

    # Fused QKV projection for BOTH live encoders in one (L, 6D) MXU stage.
    qkv_all = jnp.dot(x.astype(jnp.bfloat16), wqkv_ref[...],
                      preferred_element_type=jnp.float32)

    y0 = _encoder_body(x, qkv_all[:, :3 * D],
                       wa0_ref[...], w20_ref[...], vec0_ref[...])
    y2 = _encoder_body(x[L - Lt:, :], qkv_all[L - Lt:, 3 * D:],
                       wa2_ref[...], w22_ref[...], vec2_ref[...])

    o_ref[:L, :] = y0.astype(o_ref.dtype)
    o_ref[L:, :] = y2.astype(o_ref.dtype)


def _pack_params(encoders_params):
    """Pack raw per-encoder params (x @ W convention) into kernel slabs.

    NOTE: a real PyTorch checkpoint stores nn.Linear weights as (out, in) and
    Conv1d(k=1) weights as (out, in, 1); transpose / squeeze them into the
    x @ W convention used here before packing.
    """
    scale = 1.0 / (HEAD_DIM ** 0.5)
    p0, p2 = encoders_params[0], encoders_params[2]   # encoder 1 is dead work

    def qkv_cols(p):
        wq, wk, wv = p[0], p[2], p[4]
        # fold the softmax scale into Wq (and into bq below) at pack time
        return jnp.concatenate([wq * scale, wk, wv], axis=1)          # (D, 3D)

    wqkv = jnp.concatenate([qkv_cols(p0), qkv_cols(p2)],
                           axis=1).astype(jnp.bfloat16)               # (D, 6D)

    def enc_slabs(p):
        (wq, bq, wk, bk, wv, bv, wo, bo, w1, b1, w2, b2,
         g1, be1, g2, be2, gf, bef) = p
        wa = jnp.concatenate([wo, w1], axis=1).astype(jnp.bfloat16)   # (D, D+F)
        w2b = w2.astype(jnp.bfloat16)                                 # (F, D)

        def row(*vs):
            v = jnp.concatenate([jnp.asarray(u, jnp.float32).reshape(-1) for u in vs])
            return jnp.pad(v, (0, _VEC_WIDTH - v.shape[0]))

        vec = jnp.stack(
            [row(bq * scale, bk, bv), row(bo), row(b1), row(b2),
             row(g1), row(be1), row(g2), row(be2), row(gf), row(bef)],
            axis=0).astype(jnp.float32)
        assert vec.shape == (_N_VEC_ROWS, _VEC_WIDTH)
        return wa, w2b, vec

    wa0, w20, vec0 = enc_slabs(p0)
    wa2, w22, vec2 = enc_slabs(p2)
    return wqkv, wa0, w20, vec0, wa2, w22, vec2


def encoder_stack_forward(x, encoders_params, inp_lens):
    """Mirror of EncoderStack.forward(x, attn_mask=None).

    The reference hardcodes torch.cat((x_stack[0], x_stack[2]), -2) and every
    FullAttention(output_attention=False) attention map is None, so encoder 1
    never contributes to an output and is skipped; return values are identical.
    """
    assert tuple(inp_lens) == (0, 1, 2)
    B, L, D = x.shape
    assert D == D_MODEL and L % 4 == 0
    Lt = L // (2 ** inp_lens[2])

    wqkv, wa0, w20, vec0, wa2, w22, vec2 = _pack_params(encoders_params)

    out = pl.pallas_call(
        _stack_kernel,
        out_shape=jax.ShapeDtypeStruct((B, L + Lt, D), x.dtype),
        grid=(B,),
        in_specs=[
            pl.BlockSpec((None, L, D), lambda b: (b, 0, 0)),   # one batch row / step
            pl.BlockSpec(wqkv.shape, lambda b: (0, 0)),        # weight slabs stay
            pl.BlockSpec(wa0.shape, lambda b: (0, 0)),         # VMEM-resident
            pl.BlockSpec(w20.shape, lambda b: (0, 0)),
            pl.BlockSpec(vec0.shape, lambda b: (0, 0)),
            pl.BlockSpec(wa2.shape, lambda b: (0, 0)),
            pl.BlockSpec(w22.shape, lambda b: (0, 0)),
            pl.BlockSpec(vec2.shape, lambda b: (0, 0)),
        ],
        out_specs=pl.BlockSpec((None, L + Lt, D), lambda b: (b, 0, 0)),
        compiler_params=pltpu.CompilerParams(
            # one batch row per step: sharded across both TensorCores on v7x,
            # neutral sequential steps on single-TC v5e/v6e.
            dimension_semantics=("parallel",)),
    )(x, wqkv, wa0, w20, vec0, wa2, w22, vec2)

    attns = [[None] for _ in inp_lens]     # output_attention=False everywhere
    return out, attns


# ----------------------------- pure-JAX reference ----------------------------

def _ref_encoder(x, p):
    (wq, bq, wk, bk, wv, bv, wo, bo, w1, b1, w2, b2,
     g1, be1, g2, be2, gf, bef) = p
    B, Lk, D = x.shape
    H, Dh = N_HEADS, HEAD_DIM

    def ln(t, g, b):
        mu = jnp.mean(t, axis=-1, keepdims=True)
        var = jnp.mean((t - mu) ** 2, axis=-1, keepdims=True)
        return (t - mu) / jnp.sqrt(var + LN_EPS) * g + b

    q = (x @ wq + bq).reshape(B, Lk, H, Dh)
    k = (x @ wk + bk).reshape(B, Lk, H, Dh)
    v = (x @ wv + bv).reshape(B, Lk, H, Dh)
    s = jnp.einsum('blhd,bshd->bhls', q, k) / (Dh ** 0.5)
    a = jax.nn.softmax(s, axis=-1)
    o = jnp.einsum('bhls,bshd->blhd', a, v).reshape(B, Lk, D)
    o = o @ wo + bo
    x1 = ln(x + o, g1, be1)
    y = jnp.maximum(x1 @ w1 + b1, 0.0) @ w2 + b2
    return ln(ln(x1 + y, g2, be2), gf, bef)


def _ref_forward(x, encoders_params, inp_lens):
    outs = []
    for i_len, p in zip(inp_lens, encoders_params):
        inp_len = x.shape[1] // (2 ** i_len)
        outs.append(_ref_encoder(x[:, -inp_len:, :], p))
    return jnp.concatenate([outs[0], outs[2]], axis=-2)


# ------------------------------------ init -----------------------------------

def init_encoder_params(key):
    D, F = D_MODEL, D_FF
    ks = jax.random.split(key, 12)

    def w(k, shape, scale=0.05):
        return (scale * jax.random.normal(k, shape)).astype(jnp.float32)

    ones = jnp.ones((1, D), jnp.float32)
    zeros = jnp.zeros((1, D), jnp.float32)
    return [
        w(ks[0], (D, D)), w(ks[6], (1, D), 0.02),    # query proj
        w(ks[1], (D, D)), w(ks[7], (1, D), 0.02),    # key proj
        w(ks[2], (D, D)), w(ks[8], (1, D), 0.02),    # value proj
        w(ks[3], (D, D)), w(ks[9], (1, D), 0.02),    # out proj
        w(ks[4], (D, F)), w(ks[10], (1, F), 0.02),   # conv1 (1x1)
        w(ks[5], (F, D)), w(ks[11], (1, D), 0.02),   # conv2 (1x1)
        ones, zeros,                                 # norm1 gamma/beta
        ones, zeros,                                 # norm2 gamma/beta
        ones, zeros,                                 # final encoder norm gamma/beta
    ]


if __name__ == "__main__":
    B, L = 2, 16
    inp_lens = [0, 1, 2]   # encoders nominally see seq lens 16, 8, 4

    root = jax.random.PRNGKey(0)
    kx, kp = jax.random.split(root)
    x = jax.random.normal(kx, (B, L, D_MODEL), dtype=jnp.float32)

    encoders_params = []
    for _ in inp_lens:
        kp, sub = jax.random.split(kp)
        encoders_params.append(init_encoder_params(sub))

    out, attns = encoder_stack_forward(x, encoders_params, inp_lens)
    out = jax.block_until_ready(out)

    # out = cat of encoder-0 (len 16) and encoder-2 (len 4) outputs along seq.
    assert out.shape == (B, L + L // 4, D_MODEL), out.shape
    assert bool(jnp.all(jnp.isfinite(out)))

    ref = _ref_forward(x, encoders_params, inp_lens)
    err = float(jnp.max(jnp.abs(out - ref)))
    assert err < 0.1, f"max abs diff vs f32 reference: {err}"

    assert len(attns) == 3 and all(a == [None] for a in attns)
    print("KERNEL_OK")
</pallas_src>

<mosaic_0001>
module attributes {stable_mosaic.version = 11 : i64} {
  func.func @_stack_kernel(%arg0: i32, %arg1: memref<1x16x32xf32, #tpu.memory_space<vmem>>, %arg2: memref<32x192xbf16, #tpu.memory_space<vmem>>, %arg3: memref<32x96xbf16, #tpu.memory_space<vmem>>, %arg4: memref<64x32xbf16, #tpu.memory_space<vmem>>, %arg5: memref<10x128xf32, #tpu.memory_space<vmem>>, %arg6: memref<32x96xbf16, #tpu.memory_space<vmem>>, %arg7: memref<64x32xbf16, #tpu.memory_space<vmem>>, %arg8: memref<10x128xf32, #tpu.memory_space<vmem>>, %arg9: memref<1x20x32xf32, #tpu.memory_space<vmem>>) attributes {dimension_semantics = [#tpu.dimension_semantics<parallel>], iteration_bounds = array<i64: 2>, scalar_prefetch = 0 : i64, scratch_operands = 0 : i64, tpu.core_type = #tpu.core_type<tc>, window_params = [{transform_indices = @transform_0, window_bounds = array<i64: 1, 16, 32>}, {pipeline_mode = #tpu.pipeline_mode<synchronous>, transform_indices = @transform_1, window_bounds = array<i64: 32, 192>}, {pipeline_mode = #tpu.pipeline_mode<synchronous>, transform_indices = @transform_2, window_bounds = array<i64: 32, 96>}, {pipeline_mode = #tpu.pipeline_mode<synchronous>, transform_indices = @transform_3, window_bounds = array<i64: 64, 32>}, {pipeline_mode = #tpu.pipeline_mode<synchronous>, transform_indices = @transform_4, window_bounds = array<i64: 10, 128>}, {pipeline_mode = #tpu.pipeline_mode<synchronous>, transform_indices = @transform_5, window_bounds = array<i64: 32, 96>}, {pipeline_mode = #tpu.pipeline_mode<synchronous>, transform_indices = @transform_6, window_bounds = array<i64: 64, 32>}, {pipeline_mode = #tpu.pipeline_mode<synchronous>, transform_indices = @transform_7, window_bounds = array<i64: 10, 128>}, {transform_indices = @transform_8, window_bounds = array<i64: 1, 20, 32>}]} {
    %c0 = arith.constant 0 : index
    %c0_0 = arith.constant 0 : index
    %c0_1 = arith.constant 0 : index
    %0 = vector.load %arg1[%c0, %c0_0, %c0_1] : memref<1x16x32xf32, #tpu.memory_space<vmem>>, vector<1x16x32xf32>
    %1 = vector.shape_cast %0 : vector<1x16x32xf32> to vector<16x32xf32>
    %2 = arith.truncf %1 : vector<16x32xf32> to vector<16x32xbf16>
    %c0_2 = arith.constant 0 : index
    %c0_3 = arith.constant 0 : index
    %3 = vector.load %arg2[%c0_2, %c0_3] : memref<32x192xbf16, #tpu.memory_space<vmem>>, vector<32x192xbf16>
    %cst = arith.constant dense<0.000000e+00> : vector<16x192xf32>
    %4 = tpu.matmul %2, %3, %cst {dimension_numbers = #tpu.dot_dimension_numbers<[1], [0], [0], [1], [0, 0, 1, 1], [], []>} : vector<16x32xbf16>, vector<32x192xbf16>, vector<16x192xf32> -> vector<16x192xf32>
    %5 = vector.extract_strided_slice %4 {offsets = [0, 0], sizes = [16, 96], strides = [1, 1]} : vector<16x192xf32> to vector<16x96xf32>
    %c0_4 = arith.constant 0 : index
    %c0_5 = arith.constant 0 : index
    %6 = vector.load %arg3[%c0_4, %c0_5] : memref<32x96xbf16, #tpu.memory_space<vmem>>, vector<32x96xbf16>
    %c0_6 = arith.constant 0 : index
    %c0_7 = arith.constant 0 : index
    %7 = vector.load %arg4[%c0_6, %c0_7] : memref<64x32xbf16, #tpu.memory_space<vmem>>, vector<64x32xbf16>
    %c0_8 = arith.constant 0 : index
    %c0_9 = arith.constant 0 : index
    %8 = vector.load %arg5[%c0_8, %c0_9] : memref<10x128xf32, #tpu.memory_space<vmem>>, vector<10x128xf32>
    %9 = vector.extract_strided_slice %6 {offsets = [0, 0], sizes = [32, 32], strides = [1, 1]} : vector<32x96xbf16> to vector<32x32xbf16>
    %10 = vector.extract_strided_slice %6 {offsets = [0, 32], sizes = [32, 64], strides = [1, 1]} : vector<32x96xbf16> to vector<32x64xbf16>
    %11 = vector.extract_strided_slice %8 {offsets = [0, 0], sizes = [1, 96], strides = [1, 1]} : vector<10x128xf32> to vector<1x96xf32>
    %12 = vector.extract_strided_slice %8 {offsets = [1, 0], sizes = [1, 32], strides = [1, 1]} : vector<10x128xf32> to vector<1x32xf32>
    %13 = vector.extract_strided_slice %8 {offsets = [2, 0], sizes = [1, 64], strides = [1, 1]} : vector<10x128xf32> to vector<1x64xf32>
    %14 = vector.extract_strided_slice %8 {offsets = [3, 0], sizes = [1, 32], strides = [1, 1]} : vector<10x128xf32> to vector<1x32xf32>
    %15 = vector.extract_strided_slice %8 {offsets = [4, 0], sizes = [1, 32], strides = [1, 1]} : vector<10x128xf32> to vector<1x32xf32>
    %16 = vector.extract_strided_slice %8 {offsets = [5, 0], sizes = [1, 32], strides = [1, 1]} : vector<10x128xf32> to vector<1x32xf32>
    %17 = vector.extract_strided_slice %8 {offsets = [6, 0], sizes = [1, 32], strides = [1, 1]} : vector<10x128xf32> to vector<1x32xf32>
    %18 = vector.extract_strided_slice %8 {offsets = [7, 0], sizes = [1, 32], strides = [1, 1]} : vector<10x128xf32> to vector<1x32xf32>
    %19 = vector.extract_strided_slice %8 {offsets = [8, 0], sizes = [1, 32], strides = [1, 1]} : vector<10x128xf32> to vector<1x32xf32>
    %20 = vector.extract_strided_slice %8 {offsets = [9, 0], sizes = [1, 32], strides = [1, 1]} : vector<10x128xf32> to vector<1x32xf32>
    %21 = vector.broadcast %11 : vector<1x96xf32> to vector<16x96xf32>
    %22 = arith.addf %5, %21 : vector<16x96xf32>
    %23 = arith.truncf %22 : vector<16x96xf32> to vector<16x96xbf16>
    %24 = vector.extract_strided_slice %23 {offsets = [0, 0], sizes = [16, 8], strides = [1, 1]} : vector<16x96xbf16> to vector<16x8xbf16>
    %25 = vector.extract_strided_slice %23 {offsets = [0, 32], sizes = [16, 8], strides = [1, 1]} : vector<16x96xbf16> to vector<16x8xbf16>
    %26 = vector.extract_strided_slice %23 {offsets = [0, 64], sizes = [16, 8], strides = [1, 1]} : vector<16x96xbf16> to vector<16x8xbf16>
    %cst_10 = arith.constant dense<0.000000e+00> : vector<16x16xf32>
    %27 = tpu.matmul %24, %25, %cst_10 {dimension_numbers = #tpu.dot_dimension_numbers<[1], [1], [0], [0], [0, 0, 1, 0], [], []>} : vector<16x8xbf16>, vector<16x8xbf16>, vector<16x16xf32> -> vector<16x16xf32>
    %cst_11 = arith.constant dense<0xFF800000> : vector<16xf32>
    %28 = vector.multi_reduction <maximumf>, %27, %cst_11 [1] : vector<16x16xf32> to vector<16xf32>
    %29 = vector.shape_cast %28 : vector<16xf32> to vector<16x1xf32>
    %30 = vector.broadcast %29 : vector<16x1xf32> to vector<16x16xf32>
    %31 = arith.subf %27, %30 : vector<16x16xf32>
    %32 = math.exp %31 : vector<16x16xf32>
    %cst_12 = arith.constant dense<0.000000e+00> : vector<16xf32>
    %33 = vector.multi_reduction <add>, %32, %cst_12 [1] : vector<16x16xf32> to vector<16xf32>
    %34 = vector.shape_cast %33 : vector<16xf32> to vector<16x1xf32>
    %35 = tpu.reciprocal %34 {approx = true} : vector<16x1xf32> -> vector<16x1xf32>
    %36 = vector.broadcast %35 : vector<16x1xf32> to vector<16x16xf32>
    %37 = arith.mulf %32, %36 : vector<16x16xf32>
    %38 = arith.truncf %37 : vector<16x16xf32> to vector<16x16xbf16>
    %cst_13 = arith.constant dense<0.000000e+00> : vector<16x8xf32>
    %39 = tpu.matmul %38, %26, %cst_13 {dimension_numbers = #tpu.dot_dimension_numbers<[1], [0], [0], [1], [0, 0, 1, 1], [], []>} : vector<16x16xbf16>, vector<16x8xbf16>, vector<16x8xf32> -> vector<16x8xf32>
    %40 = arith.truncf %39 : vector<16x8xf32> to vector<16x8xbf16>
    %41 = vector.extract_strided_slice %9 {offsets = [0, 0], sizes = [8, 32], strides = [1, 1]} : vector<32x32xbf16> to vector<8x32xbf16>
    %cst_14 = arith.constant dense<0.000000e+00> : vector<16x32xf32>
    %42 = tpu.matmul %40, %41, %cst_14 {dimension_numbers = #tpu.dot_dimension_numbers<[1], [0], [0], [1], [0, 0, 1, 1], [], []>} : vector<16x8xbf16>, vector<8x32xbf16>, vector<16x32xf32> -> vector<16x32xf32>
    %43 = vector.extract_strided_slice %23 {offsets = [0, 8], sizes = [16, 8], strides = [1, 1]} : vector<16x96xbf16> to vector<16x8xbf16>
    %44 = vector.extract_strided_slice %23 {offsets = [0, 40], sizes = [16, 8], strides = [1, 1]} : vector<16x96xbf16> to vector<16x8xbf16>
    %45 = vector.extract_strided_slice %23 {offsets = [0, 72], sizes = [16, 8], strides = [1, 1]} : vector<16x96xbf16> to vector<16x8xbf16>
    %cst_15 = arith.constant dense<0.000000e+00> : vector<16x16xf32>
    %46 = tpu.matmul %43, %44, %cst_15 {dimension_numbers = #tpu.dot_dimension_numbers<[1], [1], [0], [0], [0, 0, 1, 0], [], []>} : vector<16x8xbf16>, vector<16x8xbf16>, vector<16x16xf32> -> vector<16x16xf32>
    %cst_16 = arith.constant dense<0xFF800000> : vector<16xf32>
    %47 = vector.multi_reduction <maximumf>, %46, %cst_16 [1] : vector<16x16xf32> to vector<16xf32>
    %48 = vector.shape_cast %47 : vector<16xf32> to vector<16x1xf32>
    %49 = vector.broadcast %48 : vector<16x1xf32> to vector<16x16xf32>
    %50 = arith.subf %46, %49 : vector<16x16xf32>
    %51 = math.exp %50 : vector<16x16xf32>
    %cst_17 = arith.constant dense<0.000000e+00> : vector<16xf32>
    %52 = vector.multi_reduction <add>, %51, %cst_17 [1] : vector<16x16xf32> to vector<16xf32>
    %53 = vector.shape_cast %52 : vector<16xf32> to vector<16x1xf32>
    %54 = tpu.reciprocal %53 {approx = true} : vector<16x1xf32> -> vector<16x1xf32>
    %55 = vector.broadcast %54 : vector<16x1xf32> to vector<16x16xf32>
    %56 = arith.mulf %51, %55 : vector<16x16xf32>
    %57 = arith.truncf %56 : vector<16x16xf32> to vector<16x16xbf16>
    %cst_18 = arith.constant dense<0.000000e+00> : vector<16x8xf32>
    %58 = tpu.matmul %57, %45, %cst_18 {dimension_numbers = #tpu.dot_dimension_numbers<[1], [0], [0], [1], [0, 0, 1, 1], [], []>} : vector<16x16xbf16>, vector<16x8xbf16>, vector<16x8xf32> -> vector<16x8xf32>
    %59 = arith.truncf %58 : vector<16x8xf32> to vector<16x8xbf16>
    %60 = vector.extract_strided_slice %9 {offsets = [8, 0], sizes = [8, 32], strides = [1, 1]} : vector<32x32xbf16> to vector<8x32xbf16>
    %cst_19 = arith.constant dense<0.000000e+00> : vector<16x32xf32>
    %61 = tpu.matmul %59, %60, %cst_19 {dimension_numbers = #tpu.dot_dimension_numbers<[1], [0], [0], [1], [0, 0, 1, 1], [], []>} : vector<16x8xbf16>, vector<8x32xbf16>, vector<16x32xf32> -> vector<16x32xf32>
    %62 = arith.addf %42, %61 : vector<16x32xf32>
    %63 = vector.extract_strided_slice %23 {offsets = [0, 16], sizes = [16, 8], strides = [1, 1]} : vector<16x96xbf16> to vector<16x8xbf16>
    %64 = vector.extract_strided_slice %23 {offsets = [0, 48], sizes = [16, 8], strides = [1, 1]} : vector<16x96xbf16> to vector<16x8xbf16>
    %65 = vector.extract_strided_slice %23 {offsets = [0, 80], sizes = [16, 8], strides = [1, 1]} : vector<16x96xbf16> to vector<16x8xbf16>
    %cst_20 = arith.constant dense<0.000000e+00> : vector<16x16xf32>
    %66 = tpu.matmul %63, %64, %cst_20 {dimension_numbers = #tpu.dot_dimension_numbers<[1], [1], [0], [0], [0, 0, 1, 0], [], []>} : vector<16x8xbf16>, vector<16x8xbf16>, vector<16x16xf32> -> vector<16x16xf32>
    %cst_21 = arith.constant dense<0xFF800000> : vector<16xf32>
    %67 = vector.multi_reduction <maximumf>, %66, %cst_21 [1] : vector<16x16xf32> to vector<16xf32>
    %68 = vector.shape_cast %67 : vector<16xf32> to vector<16x1xf32>
    %69 = vector.broadcast %68 : vector<16x1xf32> to vector<16x16xf32>
    %70 = arith.subf %66, %69 : vector<16x16xf32>
    %71 = math.exp %70 : vector<16x16xf32>
    %cst_22 = arith.constant dense<0.000000e+00> : vector<16xf32>
    %72 = vector.multi_reduction <add>, %71, %cst_22 [1] : vector<16x16xf32> to vector<16xf32>
    %73 = vector.shape_cast %72 : vector<16xf32> to vector<16x1xf32>
    %74 = tpu.reciprocal %73 {approx = true} : vector<16x1xf32> -> vector<16x1xf32>
    %75 = vector.broadcast %74 : vector<16x1xf32> to vector<16x16xf32>
    %76 = arith.mulf %71, %75 : vector<16x16xf32>
    %77 = arith.truncf %76 : vector<16x16xf32> to vector<16x16xbf16>
    %cst_23 = arith.constant dense<0.000000e+00> : vector<16x8xf32>
    %78 = tpu.matmul %77, %65, %cst_23 {dimension_numbers = #tpu.dot_dimension_numbers<[1], [0], [0], [1], [0, 0, 1, 1], [], []>} : vector<16x16xbf16>, vector<16x8xbf16>, vector<16x8xf32> -> vector<16x8xf32>
    %79 = arith.truncf %78 : vector<16x8xf32> to vector<16x8xbf16>
    %80 = vector.extract_strided_slice %9 {offsets = [16, 0], sizes = [8, 32], strides = [1, 1]} : vector<32x32xbf16> to vector<8x32xbf16>
    %cst_24 = arith.constant dense<0.000000e+00> : vector<16x32xf32>
    %81 = tpu.matmul %79, %80, %cst_24 {dimension_numbers = #tpu.dot_dimension_numbers<[1], [0], [0], [1], [0, 0, 1, 1], [], []>} : vector<16x8xbf16>, vector<8x32xbf16>, vector<16x32xf32> -> vector<16x32xf32>
    %82 = arith.addf %62, %81 : vector<16x32xf32>
    %83 = vector.extract_strided_slice %23 {offsets = [0, 24], sizes = [16, 8], strides = [1, 1]} : vector<16x96xbf16> to vector<16x8xbf16>
    %84 = vector.extract_strided_slice %23 {offsets = [0, 56], sizes = [16, 8], strides = [1, 1]} : vector<16x96xbf16> to vector<16x8xbf16>
    %85 = vector.extract_strided_slice %23 {offsets = [0, 88], sizes = [16, 8], strides = [1, 1]} : vector<16x96xbf16> to vector<16x8xbf16>
    %cst_25 = arith.constant dense<0.000000e+00> : vector<16x16xf32>
    %86 = tpu.matmul %83, %84, %cst_25 {dimension_numbers = #tpu.dot_dimension_numbers<[1], [1], [0], [0], [0, 0, 1, 0], [], []>} : vector<16x8xbf16>, vector<16x8xbf16>, vector<16x16xf32> -> vector<16x16xf32>
    %cst_26 = arith.constant dense<0xFF800000> : vector<16xf32>
    %87 = vector.multi_reduction <maximumf>, %86, %cst_26 [1] : vector<16x16xf32> to vector<16xf32>
    %88 = vector.shape_cast %87 : vector<16xf32> to vector<16x1xf32>
    %89 = vector.broadcast %88 : vector<16x1xf32> to vector<16x16xf32>
    %90 = arith.subf %86, %89 : vector<16x16xf32>
    %91 = math.exp %90 : vector<16x16xf32>
    %cst_27 = arith.constant dense<0.000000e+00> : vector<16xf32>
    %92 = vector.multi_reduction <add>, %91, %cst_27 [1] : vector<16x16xf32> to vector<16xf32>
    %93 = vector.shape_cast %92 : vector<16xf32> to vector<16x1xf32>
    %94 = tpu.reciprocal %93 {approx = true} : vector<16x1xf32> -> vector<16x1xf32>
    %95 = vector.broadcast %94 : vector<16x1xf32> to vector<16x16xf32>
    %96 = arith.mulf %91, %95 : vector<16x16xf32>
    %97 = arith.truncf %96 : vector<16x16xf32> to vector<16x16xbf16>
    %cst_28 = arith.constant dense<0.000000e+00> : vector<16x8xf32>
    %98 = tpu.matmul %97, %85, %cst_28 {dimension_numbers = #tpu.dot_dimension_numbers<[1], [0], [0], [1], [0, 0, 1, 1], [], []>} : vector<16x16xbf16>, vector<16x8xbf16>, vector<16x8xf32> -> vector<16x8xf32>
    %99 = arith.truncf %98 : vector<16x8xf32> to vector<16x8xbf16>
    %100 = vector.extract_strided_slice %9 {offsets = [24, 0], sizes = [8, 32], strides = [1, 1]} : vector<32x32xbf16> to vector<8x32xbf16>
    %cst_29 = arith.constant dense<0.000000e+00> : vector<16x32xf32>
    %101 = tpu.matmul %99, %100, %cst_29 {dimension_numbers = #tpu.dot_dimension_numbers<[1], [0], [0], [1], [0, 0, 1, 1], [], []>} : vector<16x8xbf16>, vector<8x32xbf16>, vector<16x32xf32> -> vector<16x32xf32>
    %102 = arith.addf %82, %101 : vector<16x32xf32>
    %103 = vector.broadcast %12 : vector<1x32xf32> to vector<16x32xf32>
    %104 = arith.addf %102, %103 : vector<16x32xf32>
    %105 = arith.addf %1, %104 : vector<16x32xf32>
    %cst_30 = arith.constant dense<0.000000e+00> : vector<16xf32>
    %106 = vector.multi_reduction <add>, %105, %cst_30 [1] : vector<16x32xf32> to vector<16xf32>
    %107 = vector.shape_cast %106 : vector<16xf32> to vector<16x1xf32>
    %cst_31 = arith.constant 3.200000e+01 : f32
    %108 = vector.broadcast %cst_31 : f32 to vector<16x1xf32>
    %109 = arith.divf %107, %108 : vector<16x1xf32>
    %110 = vector.broadcast %109 : vector<16x1xf32> to vector<16x32xf32>
    %111 = arith.subf %105, %110 : vector<16x32xf32>
    %112 = arith.mulf %111, %111 : vector<16x32xf32>
    %cst_32 = arith.constant dense<0.000000e+00> : vector<16xf32>
    %113 = vector.multi_reduction <add>, %112, %cst_32 [1] : vector<16x32xf32> to vector<16xf32>
    %114 = vector.shape_cast %113 : vector<16xf32> to vector<16x1xf32>
    %cst_33 = arith.constant 3.200000e+01 : f32
    %115 = vector.broadcast %cst_33 : f32 to vector<16x1xf32>
    %116 = arith.divf %114, %115 : vector<16x1xf32>
    %cst_34 = arith.constant 9.99999974E-6 : f32
    %117 = vector.broadcast %cst_34 : f32 to vector<16x1xf32>
    %118 = arith.addf %116, %117 : vector<16x1xf32>
    %119 = math.rsqrt %118 : vector<16x1xf32>
    %120 = vector.broadcast %119 : vector<16x1xf32> to vector<16x32xf32>
    %121 = arith.mulf %111, %120 : vector<16x32xf32>
    %122 = vector.broadcast %15 : vector<1x32xf32> to vector<16x32xf32>
    %123 = arith.mulf %121, %122 : vector<16x32xf32>
    %124 = vector.broadcast %16 : vector<1x32xf32> to vector<16x32xf32>
    %125 = arith.addf %123, %124 : vector<16x32xf32>
    %126 = arith.truncf %125 : vector<16x32xf32> to vector<16x32xbf16>
    %cst_35 = arith.constant dense<0.000000e+00> : vector<16x64xf32>
    %127 = tpu.matmul %126, %10, %cst_35 {dimension_numbers = #tpu.dot_dimension_numbers<[1], [0], [0], [1], [0, 0, 1, 1], [], []>} : vector<16x32xbf16>, vector<32x64xbf16>, vector<16x64xf32> -> vector<16x64xf32>
    %128 = vector.broadcast %13 : vector<1x64xf32> to vector<16x64xf32>
    %129 = arith.addf %127, %128 : vector<16x64xf32>
    %cst_36 = arith.constant 0.000000e+00 : f32
    %130 = vector.broadcast %cst_36 : f32 to vector<16x64xf32>
    %131 = arith.maximumf %129, %130 : vector<16x64xf32>
    %132 = arith.truncf %131 : vector<16x64xf32> to vector<16x64xbf16>
    %cst_37 = arith.constant dense<0.000000e+00> : vector<16x32xf32>
    %133 = tpu.matmul %132, %7, %cst_37 {dimension_numbers = #tpu.dot_dimension_numbers<[1], [0], [0], [1], [0, 0, 1, 1], [], []>} : vector<16x64xbf16>, vector<64x32xbf16>, vector<16x32xf32> -> vector<16x32xf32>
    %134 = vector.broadcast %14 : vector<1x32xf32> to vector<16x32xf32>
    %135 = arith.addf %133, %134 : vector<16x32xf32>
    %136 = arith.addf %125, %135 : vector<16x32xf32>
    %cst_38 = arith.constant dense<0.000000e+00> : vector<16xf32>
    %137 = vector.multi_reduction <add>, %136, %cst_38 [1] : vector<16x32xf32> to vector<16xf32>
    %138 = vector.shape_cast %137 : vector<16xf32> to vector<16x1xf32>
    %cst_39 = arith.constant 3.200000e+01 : f32
    %139 = vector.broadcast %cst_39 : f32 to vector<16x1xf32>
    %140 = arith.divf %138, %139 : vector<16x1xf32>
    %141 = vector.broadcast %140 : vector<16x1xf32> to vector<16x32xf32>
    %142 = arith.subf %136, %141 : vector<16x32xf32>
    %143 = arith.mulf %142, %142 : vector<16x32xf32>
    %cst_40 = arith.constant dense<0.000000e+00> : vector<16xf32>
    %144 = vector.multi_reduction <add>, %143, %cst_40 [1] : vector<16x32xf32> to vector<16xf32>
    %145 = vector.shape_cast %144 : vector<16xf32> to vector<16x1xf32>
    %cst_41 = arith.constant 3.200000e+01 : f32
    %146 = vector.broadcast %cst_41 : f32 to vector<16x1xf32>
    %147 = arith.divf %145, %146 : vector<16x1xf32>
    %cst_42 = arith.constant 9.99999974E-6 : f32
    %148 = vector.broadcast %cst_42 : f32 to vector<16x1xf32>
    %149 = arith.addf %147, %148 : vector<16x1xf32>
    %150 = math.rsqrt %149 : vector<16x1xf32>
    %151 = vector.broadcast %150 : vector<16x1xf32> to vector<16x32xf32>
    %152 = arith.mulf %142, %151 : vector<16x32xf32>
    %153 = vector.broadcast %17 : vector<1x32xf32> to vector<16x32xf32>
    %154 = arith.mulf %152, %153 : vector<16x32xf32>
    %155 = vector.broadcast %18 : vector<1x32xf32> to vector<16x32xf32>
    %156 = arith.addf %154, %155 : vector<16x32xf32>
    %cst_43 = arith.constant dense<0.000000e+00> : vector<16xf32>
    %157 = vector.multi_reduction <add>, %156, %cst_43 [1] : vector<16x32xf32> to vector<16xf32>
    %158 = vector.shape_cast %157 : vector<16xf32> to vector<16x1xf32>
    %cst_44 = arith.constant 3.200000e+01 : f32
    %159 = vector.broadcast %cst_44 : f32 to vector<16x1xf32>
    %160 = arith.divf %158, %159 : vector<16x1xf32>
    %161 = vector.broadcast %160 : vector<16x1xf32> to vector<16x32xf32>
    %162 = arith.subf %156, %161 : vector<16x32xf32>
    %163 = arith.mulf %162, %162 : vector<16x32xf32>
    %cst_45 = arith.constant dense<0.000000e+00> : vector<16xf32>
    %164 = vector.multi_reduction <add>, %163, %cst_45 [1] : vector<16x32xf32> to vector<16xf32>
    %165 = vector.shape_cast %164 : vector<16xf32> to vector<16x1xf32>
    %cst_46 = arith.constant 3.200000e+01 : f32
    %166 = vector.broadcast %cst_46 : f32 to vector<16x1xf32>
    %167 = arith.divf %165, %166 : vector<16x1xf32>
    %cst_47 = arith.constant 9.99999974E-6 : f32
    %168 = vector.broadcast %cst_47 : f32 to vector<16x1xf32>
    %169 = arith.addf %167, %168 : vector<16x1xf32>
    %170 = math.rsqrt %169 : vector<16x1xf32>
    %171 = vector.broadcast %170 : vector<16x1xf32> to vector<16x32xf32>
    %172 = arith.mulf %162, %171 : vector<16x32xf32>
    %173 = vector.broadcast %19 : vector<1x32xf32> to vector<16x32xf32>
    %174 = arith.mulf %172, %173 : vector<16x32xf32>
    %175 = vector.broadcast %20 : vector<1x32xf32> to vector<16x32xf32>
    %176 = arith.addf %174, %175 : vector<16x32xf32>
    %177 = vector.extract_strided_slice %1 {offsets = [12, 0], sizes = [4, 32], strides = [1, 1]} : vector<16x32xf32> to vector<4x32xf32>
    %178 = vector.extract_strided_slice %4 {offsets = [12, 96], sizes = [4, 96], strides = [1, 1]} : vector<16x192xf32> to vector<4x96xf32>
    %c0_48 = arith.constant 0 : index
    %c0_49 = arith.constant 0 : index
    %179 = vector.load %arg6[%c0_48, %c0_49] : memref<32x96xbf16, #tpu.memory_space<vmem>>, vector<32x96xbf16>
    %c0_50 = arith.constant 0 : index
    %c0_51 = arith.constant 0 : index
    %180 = vector.load %arg7[%c0_50, %c0_51] : memref<64x32xbf16, #tpu.memory_space<vmem>>, vector<64x32xbf16>
    %c0_52 = arith.constant 0 : index
    %c0_53 = arith.constant 0 : index
    %181 = vector.load %arg8[%c0_52, %c0_53] : memref<10x128xf32, #tpu.memory_space<vmem>>, vector<10x128xf32>
    %182 = vector.extract_strided_slice %179 {offsets = [0, 0], sizes = [32, 32], strides = [1, 1]} : vector<32x96xbf16> to vector<32x32xbf16>
    %183 = vector.extract_strided_slice %179 {offsets = [0, 32], sizes = [32, 64], strides = [1, 1]} : vector<32x96xbf16> to vector<32x64xbf16>
    %184 = vector.extract_strided_slice %181 {offsets = [0, 0], sizes = [1, 96], strides = [1, 1]} : vector<10x128xf32> to vector<1x96xf32>
    %185 = vector.extract_strided_slice %181 {offsets = [1, 0], sizes = [1, 32], strides = [1, 1]} : vector<10x128xf32> to vector<1x32xf32>
    %186 = vector.extract_strided_slice %181 {offsets = [2, 0], sizes = [1, 64], strides = [1, 1]} : vector<10x128xf32> to vector<1x64xf32>
    %187 = vector.extract_strided_slice %181 {offsets = [3, 0], sizes = [1, 32], strides = [1, 1]} : vector<10x128xf32> to vector<1x32xf32>
    %188 = vector.extract_strided_slice %181 {offsets = [4, 0], sizes = [1, 32], strides = [1, 1]} : vector<10x128xf32> to vector<1x32xf32>
    %189 = vector.extract_strided_slice %181 {offsets = [5, 0], sizes = [1, 32], strides = [1, 1]} : vector<10x128xf32> to vector<1x32xf32>
    %190 = vector.extract_strided_slice %181 {offsets = [6, 0], sizes = [1, 32], strides = [1, 1]} : vector<10x128xf32> to vector<1x32xf32>
    %191 = vector.extract_strided_slice %181 {offsets = [7, 0], sizes = [1, 32], strides = [1, 1]} : vector<10x128xf32> to vector<1x32xf32>
    %192 = vector.extract_strided_slice %181 {offsets = [8, 0], sizes = [1, 32], strides = [1, 1]} : vector<10x128xf32> to vector<1x32xf32>
    %193 = vector.extract_strided_slice %181 {offsets = [9, 0], sizes = [1, 32], strides = [1, 1]} : vector<10x128xf32> to vector<1x32xf32>
    %194 = vector.broadcast %184 : vector<1x96xf32> to vector<4x96xf32>
    %195 = arith.addf %178, %194 : vector<4x96xf32>
    %196 = arith.truncf %195 : vector<4x96xf32> to vector<4x96xbf16>
    %197 = vector.extract_strided_slice %196 {offsets = [0, 0], sizes = [4, 8], strides = [1, 1]} : vector<4x96xbf16> to vector<4x8xbf16>
    %198 = vector.extract_strided_slice %196 {offsets = [0, 32], sizes = [4, 8], strides = [1, 1]} : vector<4x96xbf16> to vector<4x8xbf16>
    %199 = vector.extract_strided_slice %196 {offsets = [0, 64], sizes = [4, 8], strides = [1, 1]} : vector<4x96xbf16> to vector<4x8xbf16>
    %cst_54 = arith.constant dense<0.000000e+00> : vector<4x4xf32>
    %200 = tpu.matmul %197, %198, %cst_54 {dimension_numbers = #tpu.dot_dimension_numbers<[1], [1], [0], [0], [0, 0, 1, 0], [], []>} : vector<4x8xbf16>, vector<4x8xbf16>, vector<4x4xf32> -> vector<4x4xf32>
    %cst_55 = arith.constant dense<0xFF800000> : vector<4xf32>
    %201 = vector.multi_reduction <maximumf>, %200, %cst_55 [1] : vector<4x4xf32> to vector<4xf32>
    %202 = vector.shape_cast %201 : vector<4xf32> to vector<4x1xf32>
    %203 = vector.broadcast %202 : vector<4x1xf32> to vector<4x4xf32>
    %204 = arith.subf %200, %203 : vector<4x4xf32>
    %205 = math.exp %204 : vector<4x4xf32>
    %cst_56 = arith.constant dense<0.000000e+00> : vector<4xf32>
    %206 = vector.multi_reduction <add>, %205, %cst_56 [1] : vector<4x4xf32> to vector<4xf32>
    %207 = vector.shape_cast %206 : vector<4xf32> to vector<4x1xf32>
    %208 = tpu.reciprocal %207 {approx = true} : vector<4x1xf32> -> vector<4x1xf32>
    %209 = vector.broadcast %208 : vector<4x1xf32> to vector<4x4xf32>
    %210 = arith.mulf %205, %209 : vector<4x4xf32>
    %211 = arith.truncf %210 : vector<4x4xf32> to vector<4x4xbf16>
    %cst_57 = arith.constant dense<0.000000e+00> : vector<4x8xf32>
    %212 = tpu.matmul %211, %199, %cst_57 {dimension_numbers = #tpu.dot_dimension_numbers<[1], [0], [0], [1], [0, 0, 1, 1], [], []>} : vector<4x4xbf16>, vector<4x8xbf16>, vector<4x8xf32> -> vector<4x8xf32>
    %213 = arith.truncf %212 : vector<4x8xf32> to vector<4x8xbf16>
    %214 = vector.extract_strided_slice %182 {offsets = [0, 0], sizes = [8, 32], strides = [1, 1]} : vector<32x32xbf16> to vector<8x32xbf16>
    %cst_58 = arith.constant dense<0.000000e+00> : vector<4x32xf32>
    %215 = tpu.matmul %213, %214, %cst_58 {dimension_numbers = #tpu.dot_dimension_numbers<[1], [0], [0], [1], [0, 0, 1, 1], [], []>} : vector<4x8xbf16>, vector<8x32xbf16>, vector<4x32xf32> -> vector<4x32xf32>
    %216 = vector.extract_strided_slice %196 {offsets = [0, 8], sizes = [4, 8], strides = [1, 1]} : vector<4x96xbf16> to vector<4x8xbf16>
    %217 = vector.extract_strided_slice %196 {offsets = [0, 40], sizes = [4, 8], strides = [1, 1]} : vector<4x96xbf16> to vector<4x8xbf16>
    %218 = vector.extract_strided_slice %196 {offsets = [0, 72], sizes = [4, 8], strides = [1, 1]} : vector<4x96xbf16> to vector<4x8xbf16>
    %cst_59 = arith.constant dense<0.000000e+00> : vector<4x4xf32>
    %219 = tpu.matmul %216, %217, %cst_59 {dimension_numbers = #tpu.dot_dimension_numbers<[1], [1], [0], [0], [0, 0, 1, 0], [], []>} : vector<4x8xbf16>, vector<4x8xbf16>, vector<4x4xf32> -> vector<4x4xf32>
    %cst_60 = arith.constant dense<0xFF800000> : vector<4xf32>
    %220 = vector.multi_reduction <maximumf>, %219, %cst_60 [1] : vector<4x4xf32> to vector<4xf32>
    %221 = vector.shape_cast %220 : vector<4xf32> to vector<4x1xf32>
    %222 = vector.broadcast %221 : vector<4x1xf32> to vector<4x4xf32>
    %223 = arith.subf %219, %222 : vector<4x4xf32>
    %224 = math.exp %223 : vector<4x4xf32>
    %cst_61 = arith.constant dense<0.000000e+00> : vector<4xf32>
    %225 = vector.multi_reduction <add>, %224, %cst_61 [1] : vector<4x4xf32> to vector<4xf32>
    %226 = vector.shape_cast %225 : vector<4xf32> to vector<4x1xf32>
    %227 = tpu.reciprocal %226 {approx = true} : vector<4x1xf32> -> vector<4x1xf32>
    %228 = vector.broadcast %227 : vector<4x1xf32> to vector<4x4xf32>
    %229 = arith.mulf %224, %228 : vector<4x4xf32>
    %230 = arith.truncf %229 : vector<4x4xf32> to vector<4x4xbf16>
    %cst_62 = arith.constant dense<0.000000e+00> : vector<4x8xf32>
    %231 = tpu.matmul %230, %218, %cst_62 {dimension_numbers = #tpu.dot_dimension_numbers<[1], [0], [0], [1], [0, 0, 1, 1], [], []>} : vector<4x4xbf16>, vector<4x8xbf16>, vector<4x8xf32> -> vector<4x8xf32>
    %232 = arith.truncf %231 : vector<4x8xf32> to vector<4x8xbf16>
    %233 = vector.extract_strided_slice %182 {offsets = [8, 0], sizes = [8, 32], strides = [1, 1]} : vector<32x32xbf16> to vector<8x32xbf16>
    %cst_63 = arith.constant dense<0.000000e+00> : vector<4x32xf32>
    %234 = tpu.matmul %232, %233, %cst_63 {dimension_numbers = #tpu.dot_dimension_numbers<[1], [0], [0], [1], [0, 0, 1, 1], [], []>} : vector<4x8xbf16>, vector<8x32xbf16>, vector<4x32xf32> -> vector<4x32xf32>
    %235 = arith.addf %215, %234 : vector<4x32xf32>
    %236 = vector.extract_strided_slice %196 {offsets = [0, 16], sizes = [4, 8], strides = [1, 1]} : vector<4x96xbf16> to vector<4x8xbf16>
    %237 = vector.extract_strided_slice %196 {offsets = [0, 48], sizes = [4, 8], strides = [1, 1]} : vector<4x96xbf16> to vector<4x8xbf16>
    %238 = vector.extract_strided_slice %196 {offsets = [0, 80], sizes = [4, 8], strides = [1, 1]} : vector<4x96xbf16> to vector<4x8xbf16>
    %cst_64 = arith.constant dense<0.000000e+00> : vector<4x4xf32>
    %239 = tpu.matmul %236, %237, %cst_64 {dimension_numbers = #tpu.dot_dimension_numbers<[1], [1], [0], [0], [0, 0, 1, 0], [], []>} : vector<4x8xbf16>, vector<4x8xbf16>, vector<4x4xf32> -> vector<4x4xf32>
    %cst_65 = arith.constant dense<0xFF800000> : vector<4xf32>
    %240 = vector.multi_reduction <maximumf>, %239, %cst_65 [1] : vector<4x4xf32> to vector<4xf32>
    %241 = vector.shape_cast %240 : vector<4xf32> to vector<4x1xf32>
    %242 = vector.broadcast %241 : vector<4x1xf32> to vector<4x4xf32>
    %243 = arith.subf %239, %242 : vector<4x4xf32>
    %244 = math.exp %243 : vector<4x4xf32>
    %cst_66 = arith.constant dense<0.000000e+00> : vector<4xf32>
    %245 = vector.multi_reduction <add>, %244, %cst_66 [1] : vector<4x4xf32> to vector<4xf32>
    %246 = vector.shape_cast %245 : vector<4xf32> to vector<4x1xf32>
    %247 = tpu.reciprocal %246 {approx = true} : vector<4x1xf32> -> vector<4x1xf32>
    %248 = vector.broadcast %247 : vector<4x1xf32> to vector<4x4xf32>
    %249 = arith.mulf %244, %248 : vector<4x4xf32>
    %250 = arith.truncf %249 : vector<4x4xf32> to vector<4x4xbf16>
    %cst_67 = arith.constant dense<0.000000e+00> : vector<4x8xf32>
    %251 = tpu.matmul %250, %238, %cst_67 {dimension_numbers = #tpu.dot_dimension_numbers<[1], [0], [0], [1], [0, 0, 1, 1], [], []>} : vector<4x4xbf16>, vector<4x8xbf16>, vector<4x8xf32> -> vector<4x8xf32>
    %252 = arith.truncf %251 : vector<4x8xf32> to vector<4x8xbf16>
    %253 = vector.extract_strided_slice %182 {offsets = [16, 0], sizes = [8, 32], strides = [1, 1]} : vector<32x32xbf16> to vector<8x32xbf16>
    %cst_68 = arith.constant dense<0.000000e+00> : vector<4x32xf32>
    %254 = tpu.matmul %252, %253, %cst_68 {dimension_numbers = #tpu.dot_dimension_numbers<[1], [0], [0], [1], [0, 0, 1, 1], [], []>} : vector<4x8xbf16>, vector<8x32xbf16>, vector<4x32xf32> -> vector<4x32xf32>
    %255 = arith.addf %235, %254 : vector<4x32xf32>
    %256 = vector.extract_strided_slice %196 {offsets = [0, 24], sizes = [4, 8], strides = [1, 1]} : vector<4x96xbf16> to vector<4x8xbf16>
    %257 = vector.extract_strided_slice %196 {offsets = [0, 56], sizes = [4, 8], strides = [1, 1]} : vector<4x96xbf16> to vector<4x8xbf16>
    %258 = vector.extract_strided_slice %196 {offsets = [0, 88], sizes = [4, 8], strides = [1, 1]} : vector<4x96xbf16> to vector<4x8xbf16>
    %cst_69 = arith.constant dense<0.000000e+00> : vector<4x4xf32>
    %259 = tpu.matmul %256, %257, %cst_69 {dimension_numbers = #tpu.dot_dimension_numbers<[1], [1], [0], [0], [0, 0, 1, 0], [], []>} : vector<4x8xbf16>, vector<4x8xbf16>, vector<4x4xf32> -> vector<4x4xf32>
    %cst_70 = arith.constant dense<0xFF800000> : vector<4xf32>
    %260 = vector.multi_reduction <maximumf>, %259, %cst_70 [1] : vector<4x4xf32> to vector<4xf32>
    %261 = vector.shape_cast %260 : vector<4xf32> to vector<4x1xf32>
    %262 = vector.broadcast %261 : vector<4x1xf32> to vector<4x4xf32>
    %263 = arith.subf %259, %262 : vector<4x4xf32>
    %264 = math.exp %263 : vector<4x4xf32>
    %cst_71 = arith.constant dense<0.000000e+00> : vector<4xf32>
    %265 = vector.multi_reduction <add>, %264, %cst_71 [1] : vector<4x4xf32> to vector<4xf32>
    %266 = vector.shape_cast %265 : vector<4xf32> to vector<4x1xf32>
    %267 = tpu.reciprocal %266 {approx = true} : vector<4x1xf32> -> vector<4x1xf32>
    %268 = vector.broadcast %267 : vector<4x1xf32> to vector<4x4xf32>
    %269 = arith.mulf %264, %268 : vector<4x4xf32>
    %270 = arith.truncf %269 : vector<4x4xf32> to vector<4x4xbf16>
    %cst_72 = arith.constant dense<0.000000e+00> : vector<4x8xf32>
    %271 = tpu.matmul %270, %258, %cst_72 {dimension_numbers = #tpu.dot_dimension_numbers<[1], [0], [0], [1], [0, 0, 1, 1], [], []>} : vector<4x4xbf16>, vector<4x8xbf16>, vector<4x8xf32> -> vector<4x8xf32>
    %272 = arith.truncf %271 : vector<4x8xf32> to vector<4x8xbf16>
    %273 = vector.extract_strided_slice %182 {offsets = [24, 0], sizes = [8, 32], strides = [1, 1]} : vector<32x32xbf16> to vector<8x32xbf16>
    %cst_73 = arith.constant dense<0.000000e+00> : vector<4x32xf32>
    %274 = tpu.matmul %272, %273, %cst_73 {dimension_numbers = #tpu.dot_dimension_numbers<[1], [0], [0], [1], [0, 0, 1, 1], [], []>} : vector<4x8xbf16>, vector<8x32xbf16>, vector<4x32xf32> -> vector<4x32xf32>
    %275 = arith.addf %255, %274 : vector<4x32xf32>
    %276 = vector.broadcast %185 : vector<1x32xf32> to vector<4x32xf32>
    %277 = arith.addf %275, %276 : vector<4x32xf32>
    %278 = arith.addf %177, %277 : vector<4x32xf32>
    %cst_74 = arith.constant dense<0.000000e+00> : vector<4xf32>
    %279 = vector.multi_reduction <add>, %278, %cst_74 [1] : vector<4x32xf32> to vector<4xf32>
    %280 = vector.shape_cast %279 : vector<4xf32> to vector<4x1xf32>
    %cst_75 = arith.constant 3.200000e+01 : f32
    %281 = vector.broadcast %cst_75 : f32 to vector<4x1xf32>
    %282 = arith.divf %280, %281 : vector<4x1xf32>
    %283 = vector.broadcast %282 : vector<4x1xf32> to vector<4x32xf32>
    %284 = arith.subf %278, %283 : vector<4x32xf32>
    %285 = arith.mulf %284, %284 : vector<4x32xf32>
    %cst_76 = arith.constant dense<0.000000e+00> : vector<4xf32>
    %286 = vector.multi_reduction <add>, %285, %cst_76 [1] : vector<4x32xf32> to vector<4xf32>
    %287 = vector.shape_cast %286 : vector<4xf32> to vector<4x1xf32>
    %cst_77 = arith.constant 3.200000e+01 : f32
    %288 = vector.broadcast %cst_77 : f32 to vector<4x1xf32>
    %289 = arith.divf %287, %288 : vector<4x1xf32>
    %cst_78 = arith.constant 9.99999974E-6 : f32
    %290 = vector.broadcast %cst_78 : f32 to vector<4x1xf32>
    %291 = arith.addf %289, %290 : vector<4x1xf32>
    %292 = math.rsqrt %291 : vector<4x1xf32>
    %293 = vector.broadcast %292 : vector<4x1xf32> to vector<4x32xf32>
    %294 = arith.mulf %284, %293 : vector<4x32xf32>
    %295 = vector.broadcast %188 : vector<1x32xf32> to vector<4x32xf32>
    %296 = arith.mulf %294, %295 : vector<4x32xf32>
    %297 = vector.broadcast %189 : vector<1x32xf32> to vector<4x32xf32>
    %298 = arith.addf %296, %297 : vector<4x32xf32>
    %299 = arith.truncf %298 : vector<4x32xf32> to vector<4x32xbf16>
    %cst_79 = arith.constant dense<0.000000e+00> : vector<4x64xf32>
    %300 = tpu.matmul %299, %183, %cst_79 {dimension_numbers = #tpu.dot_dimension_numbers<[1], [0], [0], [1], [0, 0, 1, 1], [], []>} : vector<4x32xbf16>, vector<32x64xbf16>, vector<4x64xf32> -> vector<4x64xf32>
    %301 = vector.broadcast %186 : vector<1x64xf32> to vector<4x64xf32>
    %302 = arith.addf %300, %301 : vector<4x64xf32>
    %cst_80 = arith.constant 0.000000e+00 : f32
    %303 = vector.broadcast %cst_80 : f32 to vector<4x64xf32>
    %304 = arith.maximumf %302, %303 : vector<4x64xf32>
    %305 = arith.truncf %304 : vector<4x64xf32> to vector<4x64xbf16>
    %cst_81 = arith.constant dense<0.000000e+00> : vector<4x32xf32>
    %306 = tpu.matmul %305, %180, %cst_81 {dimension_numbers = #tpu.dot_dimension_numbers<[1], [0], [0], [1], [0, 0, 1, 1], [], []>} : vector<4x64xbf16>, vector<64x32xbf16>, vector<4x32xf32> -> vector<4x32xf32>
    %307 = vector.broadcast %187 : vector<1x32xf32> to vector<4x32xf32>
    %308 = arith.addf %306, %307 : vector<4x32xf32>
    %309 = arith.addf %298, %308 : vector<4x32xf32>
    %cst_82 = arith.constant dense<0.000000e+00> : vector<4xf32>
    %310 = vector.multi_reduction <add>, %309, %cst_82 [1] : vector<4x32xf32> to vector<4xf32>
    %311 = vector.shape_cast %310 : vector<4xf32> to vector<4x1xf32>
    %cst_83 = arith.constant 3.200000e+01 : f32
    %312 = vector.broadcast %cst_83 : f32 to vector<4x1xf32>
    %313 = arith.divf %311, %312 : vector<4x1xf32>
    %314 = vector.broadcast %313 : vector<4x1xf32> to vector<4x32xf32>
    %315 = arith.subf %309, %314 : vector<4x32xf32>
    %316 = arith.mulf %315, %315 : vector<4x32xf32>
    %cst_84 = arith.constant dense<0.000000e+00> : vector<4xf32>
    %317 = vector.multi_reduction <add>, %316, %cst_84 [1] : vector<4x32xf32> to vector<4xf32>
    %318 = vector.shape_cast %317 : vector<4xf32> to vector<4x1xf32>
    %cst_85 = arith.constant 3.200000e+01 : f32
    %319 = vector.broadcast %cst_85 : f32 to vector<4x1xf32>
    %320 = arith.divf %318, %319 : vector<4x1xf32>
    %cst_86 = arith.constant 9.99999974E-6 : f32
    %321 = vector.broadcast %cst_86 : f32 to vector<4x1xf32>
    %322 = arith.addf %320, %321 : vector<4x1xf32>
    %323 = math.rsqrt %322 : vector<4x1xf32>
    %324 = vector.broadcast %323 : vector<4x1xf32> to vector<4x32xf32>
    %325 = arith.mulf %315, %324 : vector<4x32xf32>
    %326 = vector.broadcast %190 : vector<1x32xf32> to vector<4x32xf32>
    %327 = arith.mulf %325, %326 : vector<4x32xf32>
    %328 = vector.broadcast %191 : vector<1x32xf32> to vector<4x32xf32>
    %329 = arith.addf %327, %328 : vector<4x32xf32>
    %cst_87 = arith.constant dense<0.000000e+00> : vector<4xf32>
    %330 = vector.multi_reduction <add>, %329, %cst_87 [1] : vector<4x32xf32> to vector<4xf32>
    %331 = vector.shape_cast %330 : vector<4xf32> to vector<4x1xf32>
    %cst_88 = arith.constant 3.200000e+01 : f32
    %332 = vector.broadcast %cst_88 : f32 to vector<4x1xf32>
    %333 = arith.divf %331, %332 : vector<4x1xf32>
    %334 = vector.broadcast %333 : vector<4x1xf32> to vector<4x32xf32>
    %335 = arith.subf %329, %334 : vector<4x32xf32>
    %336 = arith.mulf %335, %335 : vector<4x32xf32>
    %cst_89 = arith.constant dense<0.000000e+00> : vector<4xf32>
    %337 = vector.multi_reduction <add>, %336, %cst_89 [1] : vector<4x32xf32> to vector<4xf32>
    %338 = vector.shape_cast %337 : vector<4xf32> to vector<4x1xf32>
    %cst_90 = arith.constant 3.200000e+01 : f32
    %339 = vector.broadcast %cst_90 : f32 to vector<4x1xf32>
    %340 = arith.divf %338, %339 : vector<4x1xf32>
    %cst_91 = arith.constant 9.99999974E-6 : f32
    %341 = vector.broadcast %cst_91 : f32 to vector<4x1xf32>
    %342 = arith.addf %340, %341 : vector<4x1xf32>
    %343 = math.rsqrt %342 : vector<4x1xf32>
    %344 = vector.broadcast %343 : vector<4x1xf32> to vector<4x32xf32>
    %345 = arith.mulf %335, %344 : vector<4x32xf32>
    %346 = vector.broadcast %192 : vector<1x32xf32> to vector<4x32xf32>
    %347 = arith.mulf %345, %346 : vector<4x32xf32>
    %348 = vector.broadcast %193 : vector<1x32xf32> to vector<4x32xf32>
    %349 = arith.addf %347, %348 : vector<4x32xf32>
    %c0_92 = arith.constant 0 : index
    %c0_93 = arith.constant 0 : index
    %c0_94 = arith.constant 0 : index
    %350 = vector.load %arg9[%c0_92, %c0_93, %c0_94] : memref<1x20x32xf32, #tpu.memory_space<vmem>>, vector<1x16x32xf32>
    %351 = vector.shape_cast %350 : vector<1x16x32xf32> to vector<16x32xf32>
    %352 = vector.shape_cast %176 : vector<16x32xf32> to vector<1x16x32xf32>
    tpu.vector_store %arg9[%c0_92, %c0_93, %c0_94], %352 {strides = array<i32>} : memref<1x20x32xf32, #tpu.memory_space<vmem>>, vector<1x16x32xf32>,
    %c0_95 = arith.constant 0 : index
    %c16 = arith.constant 16 : index
    %c0_96 = arith.constant 0 : index
    %353 = vector.load %arg9[%c0_95, %c16, %c0_96] : memref<1x20x32xf32, #tpu.memory_space<vmem>>, vector<1x4x32xf32>
    %354 = vector.shape_cast %353 : vector<1x4x32xf32> to vector<4x32xf32>
    %355 = vector.shape_cast %349 : vector<4x32xf32> to vector<1x4x32xf32>
    tpu.vector_store %arg9[%c0_95, %c16, %c0_96], %355 {strides = array<i32>} : memref<1x20x32xf32, #tpu.memory_space<vmem>>, vector<1x4x32xf32>,
    return
  }
  func.func @transform_0(%arg0: i32) -> (i32, i32, i32) {
    %c0_i32 = arith.constant 0 : i32
    %c0_i32_0 = arith.constant 0 : i32
    %c0_i32_1 = arith.constant 0 : i32
    return %arg0, %c0_i32, %c0_i32_0 : i32, i32, i32
  }
  func.func @transform_1(%arg0: i32) -> (i32, i32) {
    %c0_i32 = arith.constant 0 : i32
    %c0_i32_0 = arith.constant 0 : i32
    %c0_i32_1 = arith.constant 0 : i32
    return %c0_i32, %c0_i32_0 : i32, i32
  }
  func.func @transform_2(%arg0: i32) -> (i32, i32) {
    %c0_i32 = arith.constant 0 : i32
    %c0_i32_0 = arith.constant 0 : i32
    %c0_i32_1 = arith.constant 0 : i32
    return %c0_i32, %c0_i32_0 : i32, i32
  }
  func.func @transform_3(%arg0: i32) -> (i32, i32) {
    %c0_i32 = arith.constant 0 : i32
    %c0_i32_0 = arith.constant 0 : i32
    %c0_i32_1 = arith.constant 0 : i32
    return %c0_i32, %c0_i32_0 : i32, i32
  }
  func.func @transform_4(%arg0: i32) -> (i32, i32) {
    %c0_i32 = arith.constant 0 : i32
    %c0_i32_0 = arith.constant 0 : i32
    %c0_i32_1 = arith.constant 0 : i32
    return %c0_i32, %c0_i32_0 : i32, i32
  }
  func.func @transform_5(%arg0: i32) -> (i32, i32) {
    %c0_i32 = arith.constant 0 : i32
    %c0_i32_0 = arith.constant 0 : i32
    %c0_i32_1 = arith.constant 0 : i32
    return %c0_i32, %c0_i32_0 : i32, i32
  }
  func.func @transform_6(%arg0: i32) -> (i32, i32) {
    %c0_i32 = arith.constant 0 : i32
    %c0_i32_0 = arith.constant 0 : i32
    %c0_i32_1 = arith.constant 0 : i32
    return %c0_i32, %c0_i32_0 : i32, i32
  }
  func.func @transform_7(%arg0: i32) -> (i32, i32) {
    %c0_i32 = arith.constant 0 : i32
    %c0_i32_0 = arith.constant 0 : i32
    %c0_i32_1 = arith.constant 0 : i32
    return %c0_i32, %c0_i32_0 : i32, i32
  }
  func.func @transform_8(%arg0: i32) -> (i32, i32, i32) {
    %c0_i32 = arith.constant 0 : i32
    %c0_i32_0 = arith.constant 0 : i32
    %c0_i32_1 = arith.constant 0 : i32
    return %arg0, %c0_i32, %c0_i32_0 : i32, i32, i32
  }
}

</mosaic_0001>

<llo_original>
// kernel: tpu_custom_call.1
$region0: #{tpu_custom_call.1}
  #allocation0 [shape = 'u32[]', space=smem, size = 0x4, offset = 0x4, fixed_abs, tag = 'smem constant byte address 0x4 - core index']
  #allocation1 [shape = 'u32[144,128]{1,0:T(1,128)}', space=vmem, size = 0x12000, scoped, tag = 'internal scratch']
  %s0 = inlined_call_operand.vmem [shape: f32[2,16,32], index: 0, kind: input, shape index: {}]
  %s1 = inlined_call_operand.vmem [shape: bf16[32,192], index: 1, kind: input, shape index: {}]
  %s2 = inlined_call_operand.vmem [shape: bf16[32,96], index: 2, kind: input, shape index: {}]
  %s3 = inlined_call_operand.vmem [shape: bf16[64,32], index: 3, kind: input, shape index: {}]
  %s4 = inlined_call_operand.hbm [shape: f32[10,128], index: 4, kind: input, shape index: {}]
  %s5 = inlined_call_operand.vmem [shape: bf16[32,96], index: 5, kind: input, shape index: {}]
  %s6 = inlined_call_operand.vmem [shape: bf16[64,32], index: 6, kind: input, shape index: {}]
  %s7 = inlined_call_operand.hbm [shape: f32[10,128], index: 7, kind: input, shape index: {}]
  %s8 = inlined_call_operand.vmem [shape: f32[2,20,32], index: 8, kind: output, shape index: {}]
  %s9 = sld [smem:[#allocation0]]
  $region73: #{tpu_custom_call.1} parent=0
    _
  %s11 = ssub.s32 1, %s9
  %s12 = scalar_select 0, %s11, %s9
  $region1: #{tpu_custom_call.1} parent=0
    #allocation2 [shape = 'u8[8192]{0}', space=vmem, size = 0x2000, scoped, tag = 'input window, operand 4, single buffered']
    #allocation3 [shape = 's32[2]{0}', space=sflag, size = 0x8, scoped, tag = 'scoped memory for tpu_custom_call.1']
    #allocation4 [shape = 'u8[8192]{0}', space=vmem, size = 0x2000, scoped, tag = 'input window, operand 7, single buffered']
    #allocation5 [shape = 's32[1]{0}', space=sflag, size = 0x4, scoped, tag = 'scoped memory for tpu_custom_call.1']
    %13 = vsyncpa [#allocation3], 0
    %14 = vsyncpa [#allocation5], 0
    loop: start=0, step=1, limit=4
    $region2: #{tpu_custom_call.1} parent=1 // loop_pre_header
      _
    $region3: #{tpu_custom_call.1} parent=1 // loop_header
      %s16 = sphi 0, %s20
      %p17 = scmp.ge.s32.totalorder %s16, 4
      %s26 = sphi 0, %s28
      %s29 = sphi 0, %s26
      %s30 = sphi 0, %s29
      %s46 = sphi 0, %s30
      %s50 = sphi 0, %s50
      %s52 = sphi 0, %s50
      %s53 = sphi 0, %s52
      %s67 = sphi 0, %s53
      %s71 = sphi 0, %s71
      %s73 = sphi 0, %s71
      %s74 = sphi 0, %s73
      %s88 = sphi 0, %s74
      %s92 = sphi 0, %s92
      %s94 = sphi 0, %s92
      %s95 = sphi 0, %s94
      %s109 = sphi 0, %s95
      %s113 = sphi 0, %s113
      %s115 = sphi 0, %s113
      %s116 = sphi 0, %s115
      %s130 = sphi 0, %s116
      %s134 = sphi 0, %s134
      %s136 = sphi 0, %s134
      %s137 = sphi 0, %s136
      %s151 = sphi 0, %s137
      %s155 = sphi 0, %s155
      %s157 = sphi 0, %s155
      %s158 = sphi 0, %s157
      %s172 = sphi 0, %s158
      %s176 = sphi 0, %s176
      %s178 = sphi 0, %s176
      %s179 = sphi 0, %s178
      %s193 = sphi 0, %s179
      %s199 = sphi 0, %s201
      %s202 = sphi 0, %s199
      %s203 = sphi 0, %s202
      %s219 = sphi 0, %s203
    $region4: #{tpu_custom_call.1} parent=1 // loop_header_branch
      %19 = sbr.rel (%p17) target = $region8
    $region5: #{tpu_custom_call.1} parent=1 // loop_body
      %s21 = ssub.s32 %s16, 1
      %s22 = ssub.s32 %s16, 2
      %s23 = sadd.s32 %s16, 1
      %s24 = ssub.s32 %s16, %s23
      %p25 = scmp.eq.s32.totalorder %s24, 0
      %s27 = sadd.s32 %s26, 1
      %s28 = scalar_select %p25, %s26, %s27
      %p31 = pneg %p25
      %p32 = scmp.eq.s32.totalorder %s16, 1
      %p33 = por %p31, %p32
      %p34 = scmp.ne.s32.totalorder %s26, %s29
      %p35 = scmp.eq.s32.totalorder %s16, 0
      %p36 = por %p34, %p35
      %p37 = scmp.ne.s32.totalorder %s26, %s29
      %p38 = scmp.eq.s32.totalorder %s21, 1
      %p39 = por %p37, %p38
      %p40 = scmp.ne.s32.totalorder %s29, %s30
      %p41 = scmp.eq.s32.totalorder %s21, 0
      %p42 = por %p40, %p41
      %p43 = scmp.ne.s32.totalorder %s29, %s30
      %p44 = scmp.eq.s32.totalorder %s22, 1
      %p45 = por %p43, %p44
      %p47 = scmp.ne.s32.totalorder %s30, %s46
      %p48 = scmp.eq.s32.totalorder %s22, 0
      %p49 = por %p47, %p48
      %s51 = sadd.s32 %s50, 1
      %p54 = scmp.eq.s32.totalorder %s16, 1
      %p55 = scmp.ne.s32.totalorder %s50, %s52
      %p56 = scmp.eq.s32.totalorder %s16, 0
      %p57 = por %p55, %p56
      %p58 = scmp.ne.s32.totalorder %s50, %s52
      %p59 = scmp.eq.s32.totalorder %s21, 1
      %p60 = por %p58, %p59
      %p61 = scmp.ne.s32.totalorder %s52, %s53
      %p62 = scmp.eq.s32.totalorder %s21, 0
      %p63 = por %p61, %p62
      %p64 = scmp.ne.s32.totalorder %s52, %s53
      %p65 = scmp.eq.s32.totalorder %s22, 1
      %p66 = por %p64, %p65
      %p68 = scmp.ne.s32.totalorder %s53, %s67
      %p69 = scmp.eq.s32.totalorder %s22, 0
      %p70 = por %p68, %p69
      %s72 = sadd.s32 %s71, 1
      %p75 = scmp.eq.s32.totalorder %s16, 1
      %p76 = scmp.ne.s32.totalorder %s71, %s73
      %p77 = scmp.eq.s32.totalorder %s16, 0
      %p78 = por %p76, %p77
      %p79 = scmp.ne.s32.totalorder %s71, %s73
      %p80 = scmp.eq.s32.totalorder %s21, 1
      %p81 = por %p79, %p80
      %p82 = scmp.ne.s32.totalorder %s73, %s74
      %p83 = scmp.eq.s32.totalorder %s21, 0
      %p84 = por %p82, %p83
      %p85 = scmp.ne.s32.totalorder %s73, %s74
      %p86 = scmp.eq.s32.totalorder %s22, 1
      %p87 = por %p85, %p86
      %p89 = scmp.ne.s32.totalorder %s74, %s88
      %p90 = scmp.eq.s32.totalorder %s22, 0
      %p91 = por %p89, %p90
      %s93 = sadd.s32 %s92, 1
      %p96 = scmp.eq.s32.totalorder %s16, 1
      %p97 = scmp.ne.s32.totalorder %s92, %s94
      %p98 = scmp.eq.s32.totalorder %s16, 0
      %p99 = por %p97, %p98
      %p100 = scmp.ne.s32.totalorder %s92, %s94
      %p101 = scmp.eq.s32.totalorder %s21, 1
      %p102 = por %p100, %p101
      %p103 = scmp.ne.s32.totalorder %s94, %s95
      %p104 = scmp.eq.s32.totalorder %s21, 0
      %p105 = por %p103, %p104
      %p106 = scmp.ne.s32.totalorder %s94, %s95
      %p107 = scmp.eq.s32.totalorder %s22, 1
      %p108 = por %p106, %p107
      %p110 = scmp.ne.s32.totalorder %s95, %s109
      %p111 = scmp.eq.s32.totalorder %s22, 0
      %p112 = por %p110, %p111
      %s114 = sadd.s32 %s113, 1
      %p117 = scmp.eq.s32.totalorder %s16, 1
      %p118 = scmp.ne.s32.totalorder %s113, %s115
      %p119 = scmp.eq.s32.totalorder %s16, 0
      %p120 = por %p118, %p119
      %p121 = scmp.ne.s32.totalorder %s113, %s115
      %p122 = scmp.eq.s32.totalorder %s21, 1
      %p123 = por %p121, %p122
      %p124 = scmp.ne.s32.totalorder %s115, %s116
      %p125 = scmp.eq.s32.totalorder %s21, 0
      %p126 = por %p124, %p125
      %p127 = scmp.ne.s32.totalorder %s115, %s116
      %p128 = scmp.eq.s32.totalorder %s22, 1
      %p129 = por %p127, %p128
      %p131 = scmp.ne.s32.totalorder %s116, %s130
      %p132 = scmp.eq.s32.totalorder %s22, 0
      %p133 = por %p131, %p132
      %s135 = sadd.s32 %s134, 1
      %p138 = scmp.eq.s32.totalorder %s16, 1
      %p139 = scmp.ne.s32.totalorder %s134, %s136
      %p140 = scmp.eq.s32.totalorder %s16, 0
      %p141 = por %p139, %p140
      %p142 = scmp.ne.s32.totalorder %s134, %s136
      %p143 = scmp.eq.s32.totalorder %s21, 1
      %p144 = por %p142, %p143
      %p145 = scmp.ne.s32.totalorder %s136, %s137
      %p146 = scmp.eq.s32.totalorder %s21, 0
      %p147 = por %p145, %p146
      %p148 = scmp.ne.s32.totalorder %s136, %s137
      %p149 = scmp.eq.s32.totalorder %s22, 1
      %p150 = por %p148, %p149
      %p152 = scmp.ne.s32.totalorder %s137, %s151
      %p153 = scmp.eq.s32.totalorder %s22, 0
      %p154 = por %p152, %p153
      %s156 = sadd.s32 %s155, 1
      %p159 = scmp.eq.s32.totalorder %s16, 1
      %p160 = scmp.ne.s32.totalorder %s155, %s157
      %p161 = scmp.eq.s32.totalorder %s16, 0
      %p162 = por %p160, %p161
      %p163 = scmp.ne.s32.totalorder %s155, %s157
      %p164 = scmp.eq.s32.totalorder %s21, 1
      %p165 = por %p163, %p164
      %p166 = scmp.ne.s32.totalorder %s157, %s158
      %p167 = scmp.eq.s32.totalorder %s21, 0
      %p168 = por %p166, %p167
      %p169 = scmp.ne.s32.totalorder %s157, %s158
      %p170 = scmp.eq.s32.totalorder %s22, 1
      %p171 = por %p169, %p170
      %p173 = scmp.ne.s32.totalorder %s158, %s172
      %p174 = scmp.eq.s32.totalorder %s22, 0
      %p175 = por %p173, %p174
      %s177 = sadd.s32 %s176, 1
      %p180 = scmp.eq.s32.totalorder %s16, 1
      %p181 = scmp.ne.s32.totalorder %s176, %s178
      %p182 = scmp.eq.s32.totalorder %s16, 0
      %p183 = por %p181, %p182
      %p184 = scmp.ne.s32.totalorder %s176, %s178
      %p185 = scmp.eq.s32.totalorder %s21, 1
      %p186 = por %p184, %p185
      %p187 = scmp.ne.s32.totalorder %s178, %s179
      %p188 = scmp.eq.s32.totalorder %s21, 0
      %p189 = por %p187, %p188
      %p190 = scmp.ne.s32.totalorder %s178, %s179
      %p191 = scmp.eq.s32.totalorder %s22, 1
      %p192 = por %p190, %p191
      %p194 = scmp.ne.s32.totalorder %s179, %s193
      %p195 = scmp.eq.s32.totalorder %s22, 0
      %p196 = por %p194, %p195
      %s197 = ssub.s32 %s16, %s23
      %p198 = scmp.eq.s32.totalorder %s197, 0
      %s200 = sadd.s32 %s199, 1
      %s201 = scalar_select %p198, %s199, %s200
      %p204 = pneg %p198
      %p205 = scmp.eq.s32.totalorder %s16, 1
      %p206 = por %p204, %p205
      %p207 = scmp.ne.s32.totalorder %s199, %s202
      %p208 = scmp.eq.s32.totalorder %s16, 0
      %p209 = por %p207, %p208
      %p210 = scmp.ne.s32.totalorder %s199, %s202
      %p211 = scmp.eq.s32.totalorder %s21, 1
      %p212 = por %p210, %p211
      %p213 = scmp.ne.s32.totalorder %s202, %s203
      %p214 = scmp.eq.s32.totalorder %s21, 0
      %p215 = por %p213, %p214
      %p216 = scmp.ne.s32.totalorder %s202, %s203
      %p217 = scmp.eq.s32.totalorder %s22, 1
      %p218 = por %p216, %p217
      %p220 = scmp.ne.s32.totalorder %s203, %s219
      %p221 = scmp.eq.s32.totalorder %s22, 0
      %p222 = por %p220, %p221
      %p223 = scmp.le.s32.totalorder 1, %s16
      %p224 = scmp.lt.s32.totalorder %s16, 3
      %p225 = pnand %p223, %p224
      %p226 = pneg %p225
      // Predicated region
      $region9: #{tpu_custom_call.1} parent=5 // pred_check
        _
      $region10: #{tpu_custom_call.1} parent=5 // pred_check_branch
        %228 = sbr.rel (%p225) target = $region12
      $region11: #{tpu_custom_call.1} parent=5 // pred_region
        %s229 = ssub.s32 %s16, 1
        // Predicated region
        $region13: #{tpu_custom_call.1} parent=11 // pred_check
          %p230 = pneg %p63
        $region14: #{tpu_custom_call.1} parent=11 // pred_check_branch
          %232 = sbr.rel (%p230) target = $region16
        $region15: #{tpu_custom_call.1} parent=11 // pred_region
          _
        $region16: #{tpu_custom_call.1} parent=11 // pred_fallthru
          _
        // Predicated region
        $region17: #{tpu_custom_call.1} parent=11 // pred_check
          %p233 = pneg %p84
        $region18: #{tpu_custom_call.1} parent=11 // pred_check_branch
          %235 = sbr.rel (%p233) target = $region20
        $region19: #{tpu_custom_call.1} parent=11 // pred_region
          _
        $region20: #{tpu_custom_call.1} parent=11 // pred_fallthru
          _
        // Predicated region
        $region21: #{tpu_custom_call.1} parent=11 // pred_check
          %p236 = pneg %p105
        $region22: #{tpu_custom_call.1} parent=11 // pred_check_branch
          %238 = sbr.rel (%p236) target = $region24
        $region23: #{tpu_custom_call.1} parent=11 // pred_region
          _
        $region24: #{tpu_custom_call.1} parent=11 // pred_fallthru
          _
        // Predicated region
        $region25: #{tpu_custom_call.1} parent=11 // pred_check
          %p239 = pneg %p126
        $region26: #{tpu_custom_call.1} parent=11 // pred_check_branch
          %241 = sbr.rel (%p239) target = $region28
        $region27: #{tpu_custom_call.1} parent=11 // pred_region
          %s243 = ssub.s32 256, 256
          %244 = vsyncadd [#allocation3], %s243
          %s245 = sshll.u32 [#allocation2], 4
          %s246 = int_to_ptr.vmem [resolvable:$true] %s245
          %251 = dma.hbm_to_vmem [thread:$0]  %s4, 256, %s246, [#allocation3], 128, 128, 8
        $region28: #{tpu_custom_call.1} parent=11 // pred_fallthru
          _
        // Predicated region
        $region29: #{tpu_custom_call.1} parent=11 // pred_check
          %p252 = pneg %p147
        $region30: #{tpu_custom_call.1} parent=11 // pred_check_branch
          %254 = sbr.rel (%p252) target = $region32
        $region31: #{tpu_custom_call.1} parent=11 // pred_region
          _
        $region32: #{tpu_custom_call.1} parent=11 // pred_fallthru
          _
        // Predicated region
        $region33: #{tpu_custom_call.1} parent=11 // pred_check
          %p255 = pneg %p168
        $region34: #{tpu_custom_call.1} parent=11 // pred_check_branch
          %257 = sbr.rel (%p255) target = $region36
        $region35: #{tpu_custom_call.1} parent=11 // pred_region
          _
        $region36: #{tpu_custom_call.1} parent=11 // pred_fallthru
          _
        // Predicated region
        $region37: #{tpu_custom_call.1} parent=11 // pred_check
          %p258 = pneg %p189
        $region38: #{tpu_custom_call.1} parent=11 // pred_check_branch
          %260 = sbr.rel (%p258) target = $region40
        $region39: #{tpu_custom_call.1} parent=11 // pred_region
          %s262 = ssub.s32 256, 256
          %263 = vsyncadd [#allocation5], %s262
          %s264 = sshll.u32 [#allocation4], 4
          %s265 = int_to_ptr.vmem [resolvable:$true] %s264
          %270 = dma.hbm_to_vmem [thread:$0]  %s7, 256, %s265, [#allocation5], 128, 128, 8
        $region40: #{tpu_custom_call.1} parent=11 // pred_fallthru
          _
      $region12: #{tpu_custom_call.1} parent=5 // pred_fallthru
        _
      %p271 = scmp.lt.s32.totalorder %s16, 2
      // Predicated region
      $region41: #{tpu_custom_call.1} parent=5 // pred_check
        %p272 = pneg %p271
      $region42: #{tpu_custom_call.1} parent=5 // pred_check_branch
        %274 = sbr.rel (%p272) target = $region44
      $region43: #{tpu_custom_call.1} parent=5 // pred_region
        // Predicated region
        $region45: #{tpu_custom_call.1} parent=43 // pred_check
          %p275 = pneg %p36
        $region46: #{tpu_custom_call.1} parent=43 // pred_check_branch
          %277 = sbr.rel (%p275) target = $region48
        $region47: #{tpu_custom_call.1} parent=43 // pred_region
          %p278 = scmp.lt.s32.totalorder %s16, 1
          %s279 = scalar_select %p278, %s16, 1
          %s280 = smul.addr %s279, 2
          %s281 = smul.addr %s280, 8
          %s282 = scalar_lea.vmem %s0, %s281
        $region48: #{tpu_custom_call.1} parent=43 // pred_fallthru
          _
      $region44: #{tpu_custom_call.1} parent=5 // pred_fallthru
        _
      %p283 = scmp.le.s32.totalorder 1, %s16
      %p284 = scmp.lt.s32.totalorder %s16, 3
      %p285 = pnand %p283, %p284
      %p286 = pneg %p285
      // Predicated region
      $region49: #{tpu_custom_call.1} parent=5 // pred_check
        _
      $region50: #{tpu_custom_call.1} parent=5 // pred_check_branch
        %288 = sbr.rel (%p285) target = $region52
      $region51: #{tpu_custom_call.1} parent=5 // pred_region
        %s289 = ssub.s32 %s16, 1
        // Predicated region
        $region53: #{tpu_custom_call.1} parent=51 // pred_check
          %p290 = pneg %p126
        $region54: #{tpu_custom_call.1} parent=51 // pred_check_branch
          %292 = sbr.rel (%p290) target = $region56
        $region55: #{tpu_custom_call.1} parent=51 // pred_region
          %293 = dma.done [#allocation3], 256
        $region56: #{tpu_custom_call.1} parent=51 // pred_fallthru
          _
        // Predicated region
        $region57: #{tpu_custom_call.1} parent=51 // pred_check
          %p294 = pneg %p189
        $region58: #{tpu_custom_call.1} parent=51 // pred_check_branch
          %296 = sbr.rel (%p294) target = $region60
        $region59: #{tpu_custom_call.1} parent=51 // pred_region
          %297 = dma.done [#allocation5], 256
        $region60: #{tpu_custom_call.1} parent=51 // pred_fallthru
          _
        %p298 = scmp.lt.s32.totalorder %s21, 1
        %s299 = scalar_select %p298, %s21, 1
        %s300 = smul.addr %s299, 2
        %s301 = smul.addr %s300, 8
        %s302 = scalar_lea.vmem %s0, %s301
        %p303 = pneg %p42
        %p304 = pneg %p39
        %p305 = pneg %p63
        %p306 = pneg %p60
        %p307 = pneg %p84
        %p308 = pneg %p81
        %p309 = pneg %p105
        %p310 = pneg %p102
        %p311 = pneg %p126
        %p312 = pneg %p123
        %p313 = pneg %p147
        %p314 = pneg %p144
        %p315 = pneg %p168
        %p316 = pneg %p165
        %p317 = pneg %p189
        %p318 = pneg %p186
        %p319 = pneg %p215
        %p320 = pneg %p212
        %p321 = scmp.lt.s32.totalorder %s21, 1
        %s322 = scalar_select %p321, %s21, 1
        %s323 = smul.addr %s322, 3
        %s324 = smul.addr %s323, 8
        %s325 = scalar_lea.vmem %s8, %s324
        %p326 = scmp.lt.s32.totalorder %s21, 1
        %s327 = scalar_select %p326, %s21, 1
        %s328 = smul.addr %s327, 2
        %s329 = smul.addr %s328, 8
        %s330 = scalar_lea.vmem %s0, %s329
        %p331 = scmp.lt.s32.totalorder %s21, 1
        %s332 = scalar_select %p331, %s21, 1
        %s333 = smul.addr %s332, 3
        %s334 = smul.addr %s333, 8
        %s335 = scalar_lea.vmem %s8, %s334
        %v337 = vld [vmem:[%s330] sm:$0xff]
        %v338 = vld [vmem:[%s330 + $0x8] sm:$0xff]
        %v339 = vpack.c.bf16 %v338, %v337
        %v340 = vld [vmem:[%s1] sm:$0xff]
        %v341 = vld [vmem:[%s1 + $0x8] sm:$0xff]
        %v342 = vld [vmem:[%s1 + $0x10] sm:$0xff]
        %v343 = vld [vmem:[%s1 + $0x18] sm:$0xff]
        %v348 = vunpack.c.l.b16 %v340
        %v349 = vunpack.c.h.b16 %v340
        %v350 = vunpack.c.l.b16 %v341
        %v351 = vunpack.c.h.b16 %v341
        %v352 = vunpack.c.l.b16 %v342
        %v353 = vunpack.c.h.b16 %v342
        %v354 = vunpack.c.l.b16 %v343
        %v355 = vunpack.c.h.b16 %v343
        %v356 = vpack.c.b16 %v350, %v348
        %v357 = vpack.c.b16 %v351, %v349
        %v358 = vpack.c.b16 %v354, %v352
        %v359 = vpack.c.b16 %v355, %v353
        %vm364 = vcmask 261120
        %v366 = vsel %vm364, %v339, 0
        %368 = vmatprep.subr.bf16.mxu0 %v357
        %369 = vmatpush1.bf16.msra.mxu0 %v356
        %370 = vmatprep.subr.bf16.mxu0 %v359
        %371 = vmatpush1.bf16.msra.mxu0 %v358
        %372 = vmatprep.subr.bf16.mxu0 0
        %373 = vmatpush1.bf16.msra.mxu0 0
        %374 = vmatprep.subr.bf16.mxu0 0
        %375 = vmatpush1.bf16.msra.mxu0 0
        %376 = vmatprep.subr.bf16.mxu0 0
        %377 = vmatpush1.bf16.msra.mxu0 0
        %378 = vmatprep.subr.bf16.mxu0 0
        %379 = vmatpush1.bf16.msra.mxu0 0
        %380 = vmatprep.subr.bf16.mxu0 0
        %381 = vmatpush1.bf16.msra.mxu0 0
        %382 = vmatprep.subr.bf16.mxu0 0
        %383 = vmatpush1.bf16.msra.mxu0 0
        %384 = vmatprep.subr.bf16.mxu0 0
        %385 = vmatpush1.bf16.msra.mxu0 0
        %386 = vmatprep.subr.bf16.mxu0 0
        %387 = vmatpush1.bf16.msra.mxu0 0
        %388 = vmatprep.subr.bf16.mxu0 0
        %389 = vmatpush1.bf16.msra.mxu0 0
        %390 = vmatprep.subr.bf16.mxu0 0
        %391 = vmatpush1.bf16.msra.mxu0 0
        %392 = vmatprep.subr.bf16.mxu0 0
        %393 = vmatpush1.bf16.msra.mxu0 0
        %394 = vmatprep.subr.bf16.mxu0 0
        %395 = vmatpush1.bf16.msra.mxu0 0
        %396 = vmatprep.subr.bf16.mxu0 0
        %397 = vmatpush1.bf16.msra.mxu0 0
        %398 = vmatprep.subr.bf16.mxu0 0
        %399 = vmatpush1.bf16.msra.mxu0 0
        %400 = vmatprep.mubr.bf16.mxu0 0
        %401 = vmatmul.mubr.bf16.gmra.mrb[0].mxu0 %v366
        %v402 = vpop.f32.mrb[0].mxu0
        %v403 = vadd.f32 0.0, %v402
        %v404 = vpop.f32.mrb[0].mxu0
        %v405 = vpop.f32.mrb[0].mxu0
        %v406 = vadd.f32 0.0, %v405
        %v407 = vpop.f32.mrb[0].mxu0
        %v408 = vadd.f32 0.0, %v407
        %409 = vdwg.mxu0
        %v410 = vld [vmem:[%s2] sm:$0xf]
        %v411 = vld [vmem:[%s2 + $0x4] sm:$0xf]
        %v412 = vld [vmem:[%s2 + $0x8] sm:$0xf]
        %v413 = vld [vmem:[%s2 + $0xc] sm:$0xf]
        %v414 = vld [vmem:[%s3] sm:$0xf]
        %v415 = vld [vmem:[%s3 + $0x4] sm:$0xf]
        %v416 = vld [vmem:[%s3 + $0x8] sm:$0xf]
        %v417 = vld [vmem:[%s3 + $0xc] sm:$0xf]
        %v418 = vld [vmem:[%s3 + $0x10] sm:$0xf]
        %v419 = vld [vmem:[%s3 + $0x14] sm:$0xf]
        %v420 = vld [vmem:[%s3 + $0x18] sm:$0xf]
        %v421 = vld [vmem:[%s3 + $0x1c] sm:$0xf]
        %v422 = vld [vmem:[#allocation2] sm:$0xff]
        %v423 = vld [vmem:[#allocation2 + $0x8] sm:$0x3]
        %v424 = vlaneseq
        %v425 = vshrl.u32 %v424, 7
        %v426 = vsub.s32 0, %v425
        %v427 = vrot.slane %v422, %v426
        %v428 = vadd.f32 %v403, %v427
        %v429 = vadd.f32 %v406, %v427
        %v430 = vpack.c.bf16 %v429, %v428
        %432 = vrot.lane.b32.xlu0 %v430, 96
        %v433 = vpop.permute.xlu0 %432
        %vm434 = vcmask 64512
        %v436 = vsel %vm434, %v430, 0
        %v439 = vsel %vm434, %v433, 0
        %441 = vmatprep.subr.bf16.mxu0 0
        %442 = vmatpush1.bf16.xpose.msra.mxu0 %v439
        %443 = vmatprep.subr.bf16.mxu0 0
        %444 = vmatpush1.bf16.xpose.msra.mxu0 0
        %445 = vmatprep.subr.bf16.mxu0 0
        %446 = vmatpush1.bf16.xpose.msra.mxu0 0
        %447 = vmatprep.subr.bf16.mxu0 0
        %448 = vmatpush1.bf16.xpose.msra.mxu0 0
        %449 = vmatprep.subr.bf16.mxu0 0
        %450 = vmatpush1.bf16.xpose.msra.mxu0 0
        %451 = vmatprep.subr.bf16.mxu0 0
        %452 = vmatpush1.bf16.xpose.msra.mxu0 0
        %453 = vmatprep.subr.bf16.mxu0 0
        %454 = vmatpush1.bf16.xpose.msra.mxu0 0
        %455 = vmatprep.subr.bf16.mxu0 0
        %456 = vmatpush1.bf16.xpose.msra.mxu0 0
        %457 = vmatprep.subr.bf16.mxu0 0
        %458 = vmatpush1.bf16.xpose.msra.mxu0 0
        %459 = vmatprep.subr.bf16.mxu0 0
        %460 = vmatpush1.bf16.xpose.msra.mxu0 0
        %461 = vmatprep.subr.bf16.mxu0 0
        %462 = vmatpush1.bf16.xpose.msra.mxu0 0
        %463 = vmatprep.subr.bf16.mxu0 0
        %464 = vmatpush1.bf16.xpose.msra.mxu0 0
        %465 = vmatprep.subr.bf16.mxu0 0
        %466 = vmatpush1.bf16.xpose.msra.mxu0 0
        %467 = vmatprep.subr.bf16.mxu0 0
        %468 = vmatpush1.bf16.xpose.msra.mxu0 0
        %469 = vmatprep.subr.bf16.mxu0 0
        %470 = vmatpush1.bf16.xpose.msra.mxu0 0
        %471 = vmatprep.subr.bf16.mxu0 0
        %472 = vmatpush1.bf16.xpose.msra.mxu0 0
        %473 = vmatprep.mubr.bf16.mxu0 0
        %474 = vmatmul.mubr.bf16.gmra.mrb[0].mxu0 %v436
        %v475 = vpop.f32.mrb[0].mxu0
        %v476 = vadd.f32 0.0, %v475
        %v477 = vpop.f32.mrb[0].mxu0
        %v478 = vpop.f32.mrb[0].mxu0
        %v479 = vadd.f32 0.0, %v478
        %v480 = vpop.f32.mrb[0].mxu0
        %481 = vdwg.mxu0
        %vm482 = vcmask 130048
        %v483 = vsel %vm482, %v476, -inf
        %484 = vmax.xlane.f32.xlu0 %v483
        %v485 = vpop.xlane.xlu0 %484
        %v486 = vsel %vm482, %v479, -inf
        %487 = vmax.xlane.f32.xlu0 %v486
        %v488 = vpop.xlane.xlu0 %487
        %v489 = vsub.f32 %v476, %v485
        %v490 = vsub.f32 %v479, %v488
        %v491 = vmul.f32 %v489, 1.442695
        %v492 = vpow.pop %v491
        %v493 = vmul.f32 %v490, 1.442695
        %v494 = vpow.pop %v493
        %v495 = vsel %vm482, %v492, 0.0
        %496 = vadd.xlane.f32.xlu0 %v495
        %v497 = vpop.xlane.xlu0 %496
        %v498 = vsel %vm482, %v494, 0.0
        %499 = vadd.xlane.f32.xlu0 %v498
        %v500 = vpop.xlane.xlu0 %499
        %v501 = vrcp.pop %v497
        %v502 = vrcp.pop %v500
        %v503 = vmul.f32 %v492, %v501
        %v504 = vmul.f32 %v494, %v502
        %v505 = vpack.c.bf16 %v504, %v503
        %506 = vrot.lane.b32.xlu0 %v430, 64
        %v507 = vpop.permute.xlu0 %506
        %v510 = vsel %vm482, %v505, 0
        %512 = vmatprep.subr.bf16.mxu0 0
        %513 = vmatpush1.bf16.msra.mxu0 %v507
        %514 = vmatprep.subr.bf16.mxu0 0
        %515 = vmatpush1.bf16.msra.mxu0 0
        %516 = vmatprep.subr.bf16.mxu0 0
        %517 = vmatpush1.bf16.msra.mxu0 0
        %518 = vmatprep.subr.bf16.mxu0 0
        %519 = vmatpush1.bf16.msra.mxu0 0
        %520 = vmatprep.subr.bf16.mxu0 0
        %521 = vmatpush1.bf16.msra.mxu0 0
        %522 = vmatprep.subr.bf16.mxu0 0
        %523 = vmatpush1.bf16.msra.mxu0 0
        %524 = vmatprep.subr.bf16.mxu0 0
        %525 = vmatpush1.bf16.msra.mxu0 0
        %526 = vmatprep.subr.bf16.mxu0 0
        %527 = vmatpush1.bf16.msra.mxu0 0
        %528 = vmatprep.subr.bf16.mxu0 0
        %529 = vmatpush1.bf16.msra.mxu0 0
        %530 = vmatprep.subr.bf16.mxu0 0
        %531 = vmatpush1.bf16.msra.mxu0 0
        %532 = vmatprep.subr.bf16.mxu0 0
        %533 = vmatpush1.bf16.msra.mxu0 0
        %534 = vmatprep.subr.bf16.mxu0 0
        %535 = vmatpush1.bf16.msra.mxu0 0
        %536 = vmatprep.subr.bf16.mxu0 0
        %537 = vmatpush1.bf16.msra.mxu0 0
        %538 = vmatprep.subr.bf16.mxu0 0
        %539 = vmatpush1.bf16.msra.mxu0 0
        %540 = vmatprep.subr.bf16.mxu0 0
        %541 = vmatpush1.bf16.msra.mxu0 0
        %542 = vmatprep.subr.bf16.mxu0 0
        %543 = vmatpush1.bf16.msra.mxu0 0
        %544 = vmatprep.mubr.bf16.mxu0 0
        %545 = vmatmul.mubr.bf16.gmra.mrb[0].mxu0 %v510
        %v546 = vpop.f32.mrb[0].mxu0
        %v547 = vadd.f32 0.0, %v546
        %v548 = vpop.f32.mrb[0].mxu0
        %v549 = vpop.f32.mrb[0].mxu0
        %v550 = vadd.f32 0.0, %v549
        %v551 = vpop.f32.mrb[0].mxu0
        %552 = vdwg.mxu0
        %v553 = vpack.c.bf16 %v550, %v547
        %554 = vrot.lane.b32.xlu0 %v430, 120
        %v555 = vpop.permute.xlu0 %554
        %556 = vrot.lane.b32.xlu0 %v430, 88
        %v557 = vpop.permute.xlu0 %556
        %v559 = vsel %vm434, %v555, 0
        %v562 = vsel %vm434, %v557, 0
        %564 = vmatprep.subr.bf16.mxu0 0
        %565 = vmatpush1.bf16.xpose.msra.mxu0 %v562
        %566 = vmatprep.subr.bf16.mxu0 0
        %567 = vmatpush1.bf16.xpose.msra.mxu0 0
        %568 = vmatprep.subr.bf16.mxu0 0
        %569 = vmatpush1.bf16.xpose.msra.mxu0 0
        %570 = vmatprep.subr.bf16.mxu0 0
        %571 = vmatpush1.bf16.xpose.msra.mxu0 0
        %572 = vmatprep.subr.bf16.mxu0 0
        %573 = vmatpush1.bf16.xpose.msra.mxu0 0
        %574 = vmatprep.subr.bf16.mxu0 0
        %575 = vmatpush1.bf16.xpose.msra.mxu0 0
        %576 = vmatprep.subr.bf16.mxu0 0
        %577 = vmatpush1.bf16.xpose.msra.mxu0 0
        %578 = vmatprep.subr.bf16.mxu0 0
        %579 = vmatpush1.bf16.xpose.msra.mxu0 0
        %580 = vmatprep.subr.bf16.mxu0 0
        %581 = vmatpush1.bf16.xpose.msra.mxu0 0
        %582 = vmatprep.subr.bf16.mxu0 0
        %583 = vmatpush1.bf16.xpose.msra.mxu0 0
        %584 = vmatprep.subr.bf16.mxu0 0
        %585 = vmatpush1.bf16.xpose.msra.mxu0 0
        %586 = vmatprep.subr.bf16.mxu0 0
        %587 = vmatpush1.bf16.xpose.msra.mxu0 0
        %588 = vmatprep.subr.bf16.mxu0 0
        %589 = vmatpush1.bf16.xpose.msra.mxu0 0
        %590 = vmatprep.subr.bf16.mxu0 0
        %591 = vmatpush1.bf16.xpose.msra.mxu0 0
        %592 = vmatprep.subr.bf16.mxu0 0
        %593 = vmatpush1.bf16.xpose.msra.mxu0 0
        %594 = vmatprep.subr.bf16.mxu0 0
        %595 = vmatpush1.bf16.xpose.msra.mxu0 0
        %596 = vmatprep.mubr.bf16.mxu0 0
        %597 = vmatmul.mubr.bf16.gmra.mrb[0].mxu0 %v559
        %v598 = vpop.f32.mrb[0].mxu0
        %v599 = vadd.f32 0.0, %v598
        %v600 = vpop.f32.mrb[0].mxu0
        %v601 = vpop.f32.mrb[0].mxu0
        %v602 = vadd.f32 0.0, %v601
        %v603 = vpop.f32.mrb[0].mxu0
        %604 = vdwg.mxu0
        %v605 = vsel %vm482, %v599, -inf
        %606 = vmax.xlane.f32.xlu0 %v605
        %v607 = vpop.xlane.xlu0 %606
        %v608 = vsel %vm482, %v602, -inf
        %609 = vmax.xlane.f32.xlu0 %v608
        %v610 = vpop.xlane.xlu0 %609
        %v611 = vsub.f32 %v599, %v607
        %v612 = vsub.f32 %v602, %v610
        %v613 = vmul.f32 %v611, 1.442695
        %v614 = vpow.pop %v613
        %v615 = vmul.f32 %v612, 1.442695
        %v616 = vpow.pop %v615
        %v617 = vsel %vm482, %v614, 0.0
        %618 = vadd.xlane.f32.xlu0 %v617
        %v619 = vpop.xlane.xlu0 %618
        %v620 = vsel %vm482, %v616, 0.0
        %621 = vadd.xlane.f32.xlu0 %v620
        %v622 = vpop.xlane.xlu0 %621
        %v623 = vrcp.pop %v619
        %v624 = vrcp.pop %v622
        %v625 = vmul.f32 %v614, %v623
        %v626 = vmul.f32 %v616, %v624
        %v627 = vpack.c.bf16 %v626, %v625
        %628 = vrot.lane.b32.xlu0 %v430, 56
        %v629 = vpop.permute.xlu0 %628
        %v632 = vsel %vm482, %v627, 0
        %634 = vmatprep.subr.bf16.mxu0 0
        %635 = vmatpush1.bf16.msra.mxu0 %v629
        %636 = vmatprep.subr.bf16.mxu0 0
        %637 = vmatpush1.bf16.msra.mxu0 0
        %638 = vmatprep.subr.bf16.mxu0 0
        %639 = vmatpush1.bf16.msra.mxu0 0
        %640 = vmatprep.subr.bf16.mxu0 0
        %641 = vmatpush1.bf16.msra.mxu0 0
        %642 = vmatprep.subr.bf16.mxu0 0
        %643 = vmatpush1.bf16.msra.mxu0 0
        %644 = vmatprep.subr.bf16.mxu0 0
        %645 = vmatpush1.bf16.msra.mxu0 0
        %646 = vmatprep.subr.bf16.mxu0 0
        %647 = vmatpush1.bf16.msra.mxu0 0
        %648 = vmatprep.subr.bf16.mxu0 0
        %649 = vmatpush1.bf16.msra.mxu0 0
        %650 = vmatprep.subr.bf16.mxu0 0
        %651 = vmatpush1.bf16.msra.mxu0 0
        %652 = vmatprep.subr.bf16.mxu0 0
        %653 = vmatpush1.bf16.msra.mxu0 0
        %654 = vmatprep.subr.bf16.mxu0 0
        %655 = vmatpush1.bf16.msra.mxu0 0
        %656 = vmatprep.subr.bf16.mxu0 0
        %657 = vmatpush1.bf16.msra.mxu0 0
        %658 = vmatprep.subr.bf16.mxu0 0
        %659 = vmatpush1.bf16.msra.mxu0 0
        %660 = vmatprep.subr.bf16.mxu0 0
        %661 = vmatpush1.bf16.msra.mxu0 0
        %662 = vmatprep.subr.bf16.mxu0 0
        %663 = vmatpush1.bf16.msra.mxu0 0
        %664 = vmatprep.subr.bf16.mxu0 0
        %665 = vmatpush1.bf16.msra.mxu0 0
        %666 = vmatprep.mubr.bf16.mxu0 0
        %667 = vmatmul.mubr.bf16.gmra.mrb[0].mxu0 %v632
        %v668 = vpop.f32.mrb[0].mxu0
        %v669 = vadd.f32 0.0, %v668
        %v670 = vpop.f32.mrb[0].mxu0
        %v671 = vpop.f32.mrb[0].mxu0
        %v672 = vadd.f32 0.0, %v671
        %v673 = vpop.f32.mrb[0].mxu0
        %674 = vdwg.mxu0
        %v675 = vpack.c.bf16 %v672, %v669
        %v677 = vsel %vm434, %v675, 0
        %vm679 = vcmask 1043456
        %v681 = vsel %vm679, %v411, 0
        %683 = vmatprep.subr.bf16.mxu0 0
        %684 = vmatpush1.bf16.msra.mxu0 %v681
        %685 = vmatprep.subr.bf16.mxu0 0
        %686 = vmatpush1.bf16.msra.mxu0 0
        %687 = vmatprep.subr.bf16.mxu0 0
        %688 = vmatpush1.bf16.msra.mxu0 0
        %689 = vmatprep.subr.bf16.mxu0 0
        %690 = vmatpush1.bf16.msra.mxu0 0
        %691 = vmatprep.subr.bf16.mxu0 0
        %692 = vmatpush1.bf16.msra.mxu0 0
        %693 = vmatprep.subr.bf16.mxu0 0
        %694 = vmatpush1.bf16.msra.mxu0 0
        %695 = vmatprep.subr.bf16.mxu0 0
        %696 = vmatpush1.bf16.msra.mxu0 0
        %697 = vmatprep.subr.bf16.mxu0 0
        %698 = vmatpush1.bf16.msra.mxu0 0
        %699 = vmatprep.subr.bf16.mxu0 0
        %700 = vmatpush1.bf16.msra.mxu0 0
        %701 = vmatprep.subr.bf16.mxu0 0
        %702 = vmatpush1.bf16.msra.mxu0 0
        %703 = vmatprep.subr.bf16.mxu0 0
        %704 = vmatpush1.bf16.msra.mxu0 0
        %705 = vmatprep.subr.bf16.mxu0 0
        %706 = vmatpush1.bf16.msra.mxu0 0
        %707 = vmatprep.subr.bf16.mxu0 0
        %708 = vmatpush1.bf16.msra.mxu0 0
        %709 = vmatprep.subr.bf16.mxu0 0
        %710 = vmatpush1.bf16.msra.mxu0 0
        %711 = vmatprep.subr.bf16.mxu0 0
        %712 = vmatpush1.bf16.msra.mxu0 0
        %713 = vmatprep.subr.bf16.mxu0 0
        %714 = vmatpush1.bf16.msra.mxu0 0
        %715 = vmatprep.mubr.bf16.mxu0 0
        %716 = vmatmul.mubr.bf16.gmra.mrb[0].mxu0 %v677
        %v717 = vpop.f32.mrb[0].mxu0
        %v718 = vadd.f32 0.0, %v717
        %v719 = vpop.f32.mrb[0].mxu0
        %v720 = vpop.f32.mrb[0].mxu0
        %v721 = vadd.f32 0.0, %v720
        %v722 = vpop.f32.mrb[0].mxu0
        %723 = vdwg.mxu0
        %v725 = vsel %vm434, %v553, 0
        %v728 = vsel %vm679, %v410, 0
        %730 = vmatprep.subr.bf16.mxu0 0
        %731 = vmatpush1.bf16.msra.mxu0 %v728
        %732 = vmatprep.subr.bf16.mxu0 0
        %733 = vmatpush1.bf16.msra.mxu0 0
        %734 = vmatprep.subr.bf16.mxu0 0
        %735 = vmatpush1.bf16.msra.mxu0 0
        %736 = vmatprep.subr.bf16.mxu0 0
        %737 = vmatpush1.bf16.msra.mxu0 0
        %738 = vmatprep.subr.bf16.mxu0 0
        %739 = vmatpush1.bf16.msra.mxu0 0
        %740 = vmatprep.subr.bf16.mxu0 0
        %741 = vmatpush1.bf16.msra.mxu0 0
        %742 = vmatprep.subr.bf16.mxu0 0
        %743 = vmatpush1.bf16.msra.mxu0 0
        %744 = vmatprep.subr.bf16.mxu0 0
        %745 = vmatpush1.bf16.msra.mxu0 0
        %746 = vmatprep.subr.bf16.mxu0 0
        %747 = vmatpush1.bf16.msra.mxu0 0
        %748 = vmatprep.subr.bf16.mxu0 0
        %749 = vmatpush1.bf16.msra.mxu0 0
        %750 = vmatprep.subr.bf16.mxu0 0
        %751 = vmatpush1.bf16.msra.mxu0 0
        %752 = vmatprep.subr.bf16.mxu0 0
        %753 = vmatpush1.bf16.msra.mxu0 0
        %754 = vmatprep.subr.bf16.mxu0 0
        %755 = vmatpush1.bf16.msra.mxu0 0
        %756 = vmatprep.subr.bf16.mxu0 0
        %757 = vmatpush1.bf16.msra.mxu0 0
        %758 = vmatprep.subr.bf16.mxu0 0
        %759 = vmatpush1.bf16.msra.mxu0 0
        %760 = vmatprep.subr.bf16.mxu0 0
        %761 = vmatpush1.bf16.msra.mxu0 0
        %762 = vmatprep.mubr.bf16.mxu0 0
        %763 = vmatmul.mubr.bf16.gmra.mrb[0].mxu0 %v725
        %v764 = vpop.f32.mrb[0].mxu0
        %v765 = vadd.f32 %v718, %v764
        %v766 = vpop.f32.mrb[0].mxu0
        %v767 = vpop.f32.mrb[0].mxu0
        %v768 = vadd.f32 %v721, %v767
        %v769 = vpop.f32.mrb[0].mxu0
        %770 = vdwg.mxu0
        %771 = vrot.lane.b32.xlu0 %v430, 112
        %v772 = vpop.permute.xlu0 %771
        %773 = vrot.lane.b32.xlu0 %v430, 80
        %v774 = vpop.permute.xlu0 %773
        %v776 = vsel %vm434, %v772, 0
        %v779 = vsel %vm434, %v774, 0
        %781 = vmatprep.subr.bf16.mxu0 0
        %782 = vmatpush1.bf16.xpose.msra.mxu0 %v779
        %783 = vmatprep.subr.bf16.mxu0 0
        %784 = vmatpush1.bf16.xpose.msra.mxu0 0
        %785 = vmatprep.subr.bf16.mxu0 0
        %786 = vmatpush1.bf16.xpose.msra.mxu0 0
        %787 = vmatprep.subr.bf16.mxu0 0
        %788 = vmatpush1.bf16.xpose.msra.mxu0 0
        %789 = vmatprep.subr.bf16.mxu0 0
        %790 = vmatpush1.bf16.xpose.msra.mxu0 0
        %791 = vmatprep.subr.bf16.mxu0 0
        %792 = vmatpush1.bf16.xpose.msra.mxu0 0
        %793 = vmatprep.subr.bf16.mxu0 0
        %794 = vmatpush1.bf16.xpose.msra.mxu0 0
        %795 = vmatprep.subr.bf16.mxu0 0
        %796 = vmatpush1.bf16.xpose.msra.mxu0 0
        %797 = vmatprep.subr.bf16.mxu0 0
        %798 = vmatpush1.bf16.xpose.msra.mxu0 0
        %799 = vmatprep.subr.bf16.mxu0 0
        %800 = vmatpush1.bf16.xpose.msra.mxu0 0
        %801 = vmatprep.subr.bf16.mxu0 0
        %802 = vmatpush1.bf16.xpose.msra.mxu0 0
        %803 = vmatprep.subr.bf16.mxu0 0
        %804 = vmatpush1.bf16.xpose.msra.mxu0 0
        %805 = vmatprep.subr.bf16.mxu0 0
        %806 = vmatpush1.bf16.xpose.msra.mxu0 0
        %807 = vmatprep.subr.bf16.mxu0 0
        %808 = vmatpush1.bf16.xpose.msra.mxu0 0
        %809 = vmatprep.subr.bf16.mxu0 0
        %810 = vmatpush1.bf16.xpose.msra.mxu0 0
        %811 = vmatprep.subr.bf16.mxu0 0
        %812 = vmatpush1.bf16.xpose.msra.mxu0 0
        %813 = vmatprep.mubr.bf16.mxu0 0
        %814 = vmatmul.mubr.bf16.gmra.mrb[0].mxu0 %v776
        %v815 = vpop.f32.mrb[0].mxu0
        %v816 = vadd.f32 0.0, %v815
        %v817 = vpop.f32.mrb[0].mxu0
        %v818 = vpop.f32.mrb[0].mxu0
        %v819 = vadd.f32 0.0, %v818
        %v820 = vpop.f32.mrb[0].mxu0
        %821 = vdwg.mxu0
        %v822 = vsel %vm482, %v816, -inf
        %823 = vmax.xlane.f32.xlu0 %v822
        %v824 = vpop.xlane.xlu0 %823
        %v825 = vsel %vm482, %v819, -inf
        %826 = vmax.xlane.f32.xlu0 %v825
        %v827 = vpop.xlane.xlu0 %826
        %v828 = vsub.f32 %v816, %v824
        %v829 = vsub.f32 %v819, %v827
        %v830 = vmul.f32 %v828, 1.442695
        %v831 = vpow.pop %v830
        %v832 = vmul.f32 %v829, 1.442695
        %v833 = vpow.pop %v832
        %v834 = vsel %vm482, %v831, 0.0
        %835 = vadd.xlane.f32.xlu0 %v834
        %v836 = vpop.xlane.xlu0 %835
        %v837 = vsel %vm482, %v833, 0.0
        %838 = vadd.xlane.f32.xlu0 %v837
        %v839 = vpop.xlane.xlu0 %838
        %v840 = vrcp.pop %v836
        %v841 = vrcp.pop %v839
        %v842 = vmul.f32 %v831, %v840
        %v843 = vmul.f32 %v833, %v841
        %v844 = vpack.c.bf16 %v843, %v842
        %845 = vrot.lane.b32.xlu0 %v430, 48
        %v846 = vpop.permute.xlu0 %845
        %v849 = vsel %vm482, %v844, 0
        %851 = vmatprep.subr.bf16.mxu0 0
        %852 = vmatpush1.bf16.msra.mxu0 %v846
        %853 = vmatprep.subr.bf16.mxu0 0
        %854 = vmatpush1.bf16.msra.mxu0 0
        %855 = vmatprep.subr.bf16.mxu0 0
        %856 = vmatpush1.bf16.msra.mxu0 0
        %857 = vmatprep.subr.bf16.mxu0 0
        %858 = vmatpush1.bf16.msra.mxu0 0
        %859 = vmatprep.subr.bf16.mxu0 0
        %860 = vmatpush1.bf16.msra.mxu0 0
        %861 = vmatprep.subr.bf16.mxu0 0
        %862 = vmatpush1.bf16.msra.mxu0 0
        %863 = vmatprep.subr.bf16.mxu0 0
        %864 = vmatpush1.bf16.msra.mxu0 0
        %865 = vmatprep.subr.bf16.mxu0 0
        %866 = vmatpush1.bf16.msra.mxu0 0
        %867 = vmatprep.subr.bf16.mxu0 0
        %868 = vmatpush1.bf16.msra.mxu0 0
        %869 = vmatprep.subr.bf16.mxu0 0
        %870 = vmatpush1.bf16.msra.mxu0 0
        %871 = vmatprep.subr.bf16.mxu0 0
        %872 = vmatpush1.bf16.msra.mxu0 0
        %873 = vmatprep.subr.bf16.mxu0 0
        %874 = vmatpush1.bf16.msra.mxu0 0
        %875 = vmatprep.subr.bf16.mxu0 0
        %876 = vmatpush1.bf16.msra.mxu0 0
        %877 = vmatprep.subr.bf16.mxu0 0
        %878 = vmatpush1.bf16.msra.mxu0 0
        %879 = vmatprep.subr.bf16.mxu0 0
        %880 = vmatpush1.bf16.msra.mxu0 0
        %881 = vmatprep.subr.bf16.mxu0 0
        %882 = vmatpush1.bf16.msra.mxu0 0
        %883 = vmatprep.mubr.bf16.mxu0 0
        %884 = vmatmul.mubr.bf16.gmra.mrb[0].mxu0 %v849
        %v885 = vpop.f32.mrb[0].mxu0
        %v886 = vadd.f32 0.0, %v885
        %v887 = vpop.f32.mrb[0].mxu0
        %v888 = vpop.f32.mrb[0].mxu0
        %v889 = vadd.f32 0.0, %v888
        %v890 = vpop.f32.mrb[0].mxu0
        %891 = vdwg.mxu0
        %v892 = vpack.c.bf16 %v889, %v886
        %v894 = vsel %vm434, %v892, 0
        %v897 = vsel %vm679, %v412, 0
        %899 = vmatprep.subr.bf16.mxu0 0
        %900 = vmatpush1.bf16.msra.mxu0 %v897
        %901 = vmatprep.subr.bf16.mxu0 0
        %902 = vmatpush1.bf16.msra.mxu0 0
        %903 = vmatprep.subr.bf16.mxu0 0
        %904 = vmatpush1.bf16.msra.mxu0 0
        %905 = vmatprep.subr.bf16.mxu0 0
        %906 = vmatpush1.bf16.msra.mxu0 0
        %907 = vmatprep.subr.bf16.mxu0 0
        %908 = vmatpush1.bf16.msra.mxu0 0
        %909 = vmatprep.subr.bf16.mxu0 0
        %910 = vmatpush1.bf16.msra.mxu0 0
        %911 = vmatprep.subr.bf16.mxu0 0
        %912 = vmatpush1.bf16.msra.mxu0 0
        %913 = vmatprep.subr.bf16.mxu0 0
        %914 = vmatpush1.bf16.msra.mxu0 0
        %915 = vmatprep.subr.bf16.mxu0 0
        %916 = vmatpush1.bf16.msra.mxu0 0
        %917 = vmatprep.subr.bf16.mxu0 0
        %918 = vmatpush1.bf16.msra.mxu0 0
        %919 = vmatprep.subr.bf16.mxu0 0
        %920 = vmatpush1.bf16.msra.mxu0 0
        %921 = vmatprep.subr.bf16.mxu0 0
        %922 = vmatpush1.bf16.msra.mxu0 0
        %923 = vmatprep.subr.bf16.mxu0 0
        %924 = vmatpush1.bf16.msra.mxu0 0
        %925 = vmatprep.subr.bf16.mxu0 0
        %926 = vmatpush1.bf16.msra.mxu0 0
        %927 = vmatprep.subr.bf16.mxu0 0
        %928 = vmatpush1.bf16.msra.mxu0 0
        %929 = vmatprep.subr.bf16.mxu0 0
        %930 = vmatpush1.bf16.msra.mxu0 0
        %931 = vmatprep.mubr.bf16.mxu0 0
        %932 = vmatmul.mubr.bf16.gmra.mrb[0].mxu0 %v894
        %v933 = vpop.f32.mrb[0].mxu0
        %v934 = vadd.f32 0.0, %v933
        %v935 = vpop.f32.mrb[0].mxu0
        %v936 = vpop.f32.mrb[0].mxu0
        %v937 = vadd.f32 0.0, %v936
        %v938 = vpop.f32.mrb[0].mxu0
        %939 = vdwg.mxu0
        %v940 = vadd.f32 %v765, %v934
        %v941 = vadd.f32 %v768, %v937
        %942 = vrot.lane.b32.xlu0 %v430, 104
        %v943 = vpop.permute.xlu0 %942
        %944 = vrot.lane.b32.xlu0 %v430, 72
        %v945 = vpop.permute.xlu0 %944
        %v947 = vsel %vm434, %v943, 0
        %v950 = vsel %vm434, %v945, 0
        %952 = vmatprep.subr.bf16.mxu0 0
        %953 = vmatpush1.bf16.xpose.msra.mxu0 %v950
        %954 = vmatprep.subr.bf16.mxu0 0
        %955 = vmatpush1.bf16.xpose.msra.mxu0 0
        %956 = vmatprep.subr.bf16.mxu0 0
        %957 = vmatpush1.bf16.xpose.msra.mxu0 0
        %958 = vmatprep.subr.bf16.mxu0 0
        %959 = vmatpush1.bf16.xpose.msra.mxu0 0
        %960 = vmatprep.subr.bf16.mxu0 0
        %961 = vmatpush1.bf16.xpose.msra.mxu0 0
        %962 = vmatprep.subr.bf16.mxu0 0
        %963 = vmatpush1.bf16.xpose.msra.mxu0 0
        %964 = vmatprep.subr.bf16.mxu0 0
        %965 = vmatpush1.bf16.xpose.msra.mxu0 0
        %966 = vmatprep.subr.bf16.mxu0 0
        %967 = vmatpush1.bf16.xpose.msra.mxu0 0
        %968 = vmatprep.subr.bf16.mxu0 0
        %969 = vmatpush1.bf16.xpose.msra.mxu0 0
        %970 = vmatprep.subr.bf16.mxu0 0
        %971 = vmatpush1.bf16.xpose.msra.mxu0 0
        %972 = vmatprep.subr.bf16.mxu0 0
        %973 = vmatpush1.bf16.xpose.msra.mxu0 0
        %974 = vmatprep.subr.bf16.mxu0 0
        %975 = vmatpush1.bf16.xpose.msra.mxu0 0
        %976 = vmatprep.subr.bf16.mxu0 0
        %977 = vmatpush1.bf16.xpose.msra.mxu0 0
        %978 = vmatprep.subr.bf16.mxu0 0
        %979 = vmatpush1.bf16.xpose.msra.mxu0 0
        %980 = vmatprep.subr.bf16.mxu0 0
        %981 = vmatpush1.bf16.xpose.msra.mxu0 0
        %982 = vmatprep.subr.bf16.mxu0 0
        %983 = vmatpush1.bf16.xpose.msra.mxu0 0
        %984 = vmatprep.mubr.bf16.mxu0 0
        %985 = vmatmul.mubr.bf16.gmra.mrb[0].mxu0 %v947
        %v986 = vpop.f32.mrb[0].mxu0
        %v987 = vadd.f32 0.0, %v986
        %v988 = vpop.f32.mrb[0].mxu0
        %v989 = vpop.f32.mrb[0].mxu0
        %v990 = vadd.f32 0.0, %v989
        %v991 = vpop.f32.mrb[0].mxu0
        %992 = vdwg.mxu0
        %v993 = vsel %vm482, %v987, -inf
        %994 = vmax.xlane.f32.xlu0 %v993
        %v995 = vpop.xlane.xlu0 %994
        %v996 = vsel %vm482, %v990, -inf
        %997 = vmax.xlane.f32.xlu0 %v996
        %v998 = vpop.xlane.xlu0 %997
        %v999 = vsub.f32 %v987, %v995
        %v1000 = vsub.f32 %v990, %v998
        %v1001 = vmul.f32 %v999, 1.442695
        %v1002 = vpow.pop %v1001
        %v1003 = vmul.f32 %v1000, 1.442695
        %v1004 = vpow.pop %v1003
        %v1005 = vsel %vm482, %v1002, 0.0
        %1006 = vadd.xlane.f32.xlu0 %v1005
        %v1007 = vpop.xlane.xlu0 %1006
        %v1008 = vsel %vm482, %v1004, 0.0
        %1009 = vadd.xlane.f32.xlu0 %v1008
        %v1010 = vpop.xlane.xlu0 %1009
        %v1011 = vrcp.pop %v1007
        %v1012 = vrcp.pop %v1010
        %v1013 = vmul.f32 %v1002, %v1011
        %v1014 = vmul.f32 %v1004, %v1012
        %v1015 = vpack.c.bf16 %v1014, %v1013
        %1016 = vrot.lane.b32.xlu0 %v430, 40
        %v1017 = vpop.permute.xlu0 %1016
        %v1020 = vsel %vm482, %v1015, 0
        %1022 = vmatprep.subr.bf16.mxu0 0
        %1023 = vmatpush1.bf16.msra.mxu0 %v1017
        %1024 = vmatprep.subr.bf16.mxu0 0
        %1025 = vmatpush1.bf16.msra.mxu0 0
        %1026 = vmatprep.subr.bf16.mxu0 0
        %1027 = vmatpush1.bf16.msra.mxu0 0
        %1028 = vmatprep.subr.bf16.mxu0 0
        %1029 = vmatpush1.bf16.msra.mxu0 0
        %1030 = vmatprep.subr.bf16.mxu0 0
        %1031 = vmatpush1.bf16.msra.mxu0 0
        %1032 = vmatprep.subr.bf16.mxu0 0
        %1033 = vmatpush1.bf16.msra.mxu0 0
        %1034 = vmatprep.subr.bf16.mxu0 0
        %1035 = vmatpush1.bf16.msra.mxu0 0
        %1036 = vmatprep.subr.bf16.mxu0 0
        %1037 = vmatpush1.bf16.msra.mxu0 0
        %1038 = vmatprep.subr.bf16.mxu0 0
        %1039 = vmatpush1.bf16.msra.mxu0 0
        %1040 = vmatprep.subr.bf16.mxu0 0
        %1041 = vmatpush1.bf16.msra.mxu0 0
        %1042 = vmatprep.subr.bf16.mxu0 0
        %1043 = vmatpush1.bf16.msra.mxu0 0
        %1044 = vmatprep.subr.bf16.mxu0 0
        %1045 = vmatpush1.bf16.msra.mxu0 0
        %1046 = vmatprep.subr.bf16.mxu0 0
        %1047 = vmatpush1.bf16.msra.mxu0 0
        %1048 = vmatprep.subr.bf16.mxu0 0
        %1049 = vmatpush1.bf16.msra.mxu0 0
        %1050 = vmatprep.subr.bf16.mxu0 0
        %1051 = vmatpush1.bf16.msra.mxu0 0
        %1052 = vmatprep.subr.bf16.mxu0 0
        %1053 = vmatpush1.bf16.msra.mxu0 0
        %1054 = vmatprep.mubr.bf16.mxu0 0
        %1055 = vmatmul.mubr.bf16.gmra.mrb[0].mxu0 %v1020
        %v1056 = vpop.f32.mrb[0].mxu0
        %v1057 = vadd.f32 0.0, %v1056
        %v1058 = vpop.f32.mrb[0].mxu0
        %v1059 = vpop.f32.mrb[0].mxu0
        %v1060 = vadd.f32 0.0, %v1059
        %v1061 = vpop.f32.mrb[0].mxu0
        %1062 = vdwg.mxu0
        %v1063 = vpack.c.bf16 %v1060, %v1057
        %v1065 = vsel %vm434, %v1063, 0
        %v1068 = vsel %vm679, %v413, 0
        %1070 = vmatprep.subr.bf16.mxu0 0
        %1071 = vmatpush1.bf16.msra.mxu0 %v1068
        %1072 = vmatprep.subr.bf16.mxu0 0
        %1073 = vmatpush1.bf16.msra.mxu0 0
        %1074 = vmatprep.subr.bf16.mxu0 0
        %1075 = vmatpush1.bf16.msra.mxu0 0
        %1076 = vmatprep.subr.bf16.mxu0 0
        %1077 = vmatpush1.bf16.msra.mxu0 0
        %1078 = vmatprep.subr.bf16.mxu0 0
        %1079 = vmatpush1.bf16.msra.mxu0 0
        %1080 = vmatprep.subr.bf16.mxu0 0
        %1081 = vmatpush1.bf16.msra.mxu0 0
        %1082 = vmatprep.subr.bf16.mxu0 0
        %1083 = vmatpush1.bf16.msra.mxu0 0
        %1084 = vmatprep.subr.bf16.mxu0 0
        %1085 = vmatpush1.bf16.msra.mxu0 0
        %1086 = vmatprep.subr.bf16.mxu0 0
        %1087 = vmatpush1.bf16.msra.mxu0 0
        %1088 = vmatprep.subr.bf16.mxu0 0
        %1089 = vmatpush1.bf16.msra.mxu0 0
        %1090 = vmatprep.subr.bf16.mxu0 0
        %1091 = vmatpush1.bf16.msra.mxu0 0
        %1092 = vmatprep.subr.bf16.mxu0 0
        %1093 = vmatpush1.bf16.msra.mxu0 0
        %1094 = vmatprep.subr.bf16.mxu0 0
        %1095 = vmatpush1.bf16.msra.mxu0 0
        %1096 = vmatprep.subr.bf16.mxu0 0
        %1097 = vmatpush1.bf16.msra.mxu0 0
        %1098 = vmatprep.subr.bf16.mxu0 0
        %1099 = vmatpush1.bf16.msra.mxu0 0
        %1100 = vmatprep.subr.bf16.mxu0 0
        %1101 = vmatpush1.bf16.msra.mxu0 0
        %1102 = vmatprep.mubr.bf16.mxu0 0
        %1103 = vmatmul.mubr.bf16.gmra.mrb[0].mxu0 %v1065
        %v1104 = vpop.f32.mrb[0].mxu0
        %v1105 = vadd.f32 0.0, %v1104
        %v1106 = vpop.f32.mrb[0].mxu0
        %v1107 = vpop.f32.mrb[0].mxu0
        %v1108 = vadd.f32 0.0, %v1107
        %v1109 = vpop.f32.mrb[0].mxu0
        %1110 = vdwg.mxu0
        %v1111 = vadd.f32 %v940, %v1105
        %v1112 = vadd.f32 %v941, %v1108
        %v1113 = vlaneseq
        %v1114 = vshrl.u32 %v1113, 7
        %v1115 = vsub.s32 1, %v1114
        %v1116 = vrot.slane %v422, %v1115
        %v1117 = vadd.f32 %v1111, %v1116
        %v1118 = vadd.f32 %v1112, %v1116
        %v1119 = vadd.f32 %v337, %v1117
        %v1120 = vadd.f32 %v338, %v1118
        %v1121 = vsel %vm364, %v1119, 0.0
        %1122 = vadd.xlane.f32.xlu0 %v1121
        %v1123 = vpop.xlane.xlu0 %1122
        %v1124 = vsel %vm364, %v1120, 0.0
        %1125 = vadd.xlane.f32.xlu0 %v1124
        %v1126 = vpop.xlane.xlu0 %1125
        %v1127 = vrcp.pop 32.0
        %v1128 = vmul.f32 %v1123, %v1127
        %v1129 = vmul.f32 %v1126, %v1127
        %v1130 = vsub.f32 %v1119, %v1128
        %v1131 = vsub.f32 %v1120, %v1129
        %v1132 = vmul.f32 %v1130, %v1130
        %v1133 = vmul.f32 %v1131, %v1131
        %v1134 = vsel %vm364, %v1132, 0.0
        %1135 = vadd.xlane.f32.xlu0 %v1134
        %v1136 = vpop.xlane.xlu0 %1135
        %v1137 = vsel %vm364, %v1133, 0.0
        %1138 = vadd.xlane.f32.xlu0 %v1137
        %v1139 = vpop.xlane.xlu0 %1138
        %v1140 = vmul.f32 %v1136, %v1127
        %v1141 = vmul.f32 %v1139, %v1127
        %v1142 = vadd.f32 %v1140, 1e-05
        %v1143 = vadd.f32 %v1141, 1e-05
        %v1144 = vrsqrt.pop %v1142
        %v1145 = vrsqrt.pop %v1143
        %v1146 = vmul.f32 %v1130, %v1144
        %v1147 = vmul.f32 %v1131, %v1145
        %v1148 = vlaneseq
        %v1149 = vshrl.u32 %v1148, 7
        %v1150 = vsub.s32 4, %v1149
        %v1151 = vrot.slane %v422, %v1150
        %v1152 = vmul.f32 %v1146, %v1151
        %v1153 = vmul.f32 %v1147, %v1151
        %v1154 = vlaneseq
        %v1155 = vshrl.u32 %v1154, 7
        %v1156 = vsub.s32 5, %v1155
        %v1157 = vrot.slane %v422, %v1156
        %v1158 = vadd.f32 %v1152, %v1157
        %v1159 = vadd.f32 %v1153, %v1157
        %v1160 = vpack.c.bf16 %v1159, %v1158
        %v1161 = vlaneseq
        %v1162 = vshrl.u32 %v1161, 7
        %v1163 = vsub.s32 2, %v1162
        %v1164 = vrot.slane %v422, %v1163
        %v1169 = vunpack.c.l.b16 %v410
        %v1170 = vunpack.c.l.b16 %v411
        %v1171 = vunpack.c.l.b16 %v412
        %v1172 = vunpack.c.l.b16 %v413
        %v1173 = vpack.c.b16 %v1170, %v1169
        %v1174 = vpack.c.b16 %v1172, %v1171
        %1175 = vrot.lane.b32.xlu0 %v1173, 96
        %v1176 = vpop.permute.xlu0 %1175
        %1177 = vrot.lane.b32.xlu0 %v1174, 96
        %v1178 = vpop.permute.xlu0 %1177
        %v1182 = vsel %vm364, %v1160, 0
        %1184 = vmatprep.subr.bf16.mxu0 0
        %1185 = vmatpush1.bf16.msra.mxu0 %v1176
        %1186 = vmatprep.subr.bf16.mxu0 0
        %1187 = vmatpush1.bf16.msra.mxu0 %v1178
        %1188 = vmatprep.subr.bf16.mxu0 0
        %1189 = vmatpush1.bf16.msra.mxu0 0
        %1190 = vmatprep.subr.bf16.mxu0 0
        %1191 = vmatpush1.bf16.msra.mxu0 0
        %1192 = vmatprep.subr.bf16.mxu0 0
        %1193 = vmatpush1.bf16.msra.mxu0 0
        %1194 = vmatprep.subr.bf16.mxu0 0
        %1195 = vmatpush1.bf16.msra.mxu0 0
        %1196 = vmatprep.subr.bf16.mxu0 0
        %1197 = vmatpush1.bf16.msra.mxu0 0
        %1198 = vmatprep.subr.bf16.mxu0 0
        %1199 = vmatpush1.bf16.msra.mxu0 0
        %1200 = vmatprep.subr.bf16.mxu0 0
        %1201 = vmatpush1.bf16.msra.mxu0 0
        %1202 = vmatprep.subr.bf16.mxu0 0
        %1203 = vmatpush1.bf16.msra.mxu0 0
        %1204 = vmatprep.subr.bf16.mxu0 0
        %1205 = vmatpush1.bf16.msra.mxu0 0
        %1206 = vmatprep.subr.bf16.mxu0 0
        %1207 = vmatpush1.bf16.msra.mxu0 0
        %1208 = vmatprep.subr.bf16.mxu0 0
        %1209 = vmatpush1.bf16.msra.mxu0 0
        %1210 = vmatprep.subr.bf16.mxu0 0
        %1211 = vmatpush1.bf16.msra.mxu0 0
        %1212 = vmatprep.subr.bf16.mxu0 0
        %1213 = vmatpush1.bf16.msra.mxu0 0
        %1214 = vmatprep.subr.bf16.mxu0 0
        %1215 = vmatpush1.bf16.msra.mxu0 0
        %1216 = vmatprep.mubr.bf16.mxu0 0
        %1217 = vmatmul.mubr.bf16.gmra.mrb[0].mxu0 %v1182
        %v1218 = vpop.f32.mrb[0].mxu0
        %v1219 = vadd.f32 %v1164, %v1218
        %v1220 = vpop.f32.mrb[0].mxu0
        %v1221 = vpop.f32.mrb[0].mxu0
        %v1222 = vadd.f32 %v1164, %v1221
        %v1223 = vpop.f32.mrb[0].mxu0
        %1224 = vdwg.mxu0
        %v1225 = vmax.f32 %v1219, 0.0
        %v1226 = vmax.f32 %v1222, 0.0
        %v1227 = vpack.c.bf16 %v1226, %v1225
        %v1228 = vlaneseq
        %v1229 = vshrl.u32 %v1228, 7
        %v1230 = vsub.s32 3, %v1229
        %v1231 = vrot.slane %v422, %v1230
        %v1240 = vunpack.c.l.b16 %v414
        %v1241 = vunpack.c.l.b16 %v415
        %v1242 = vunpack.c.l.b16 %v416
        %v1243 = vunpack.c.l.b16 %v417
        %v1244 = vunpack.c.l.b16 %v418
        %v1245 = vunpack.c.l.b16 %v419
        %v1246 = vunpack.c.l.b16 %v420
        %v1247 = vunpack.c.l.b16 %v421
        %v1248 = vpack.c.b16 %v1241, %v1240
        %v1249 = vpack.c.b16 %v1243, %v1242
        %v1250 = vpack.c.b16 %v1245, %v1244
        %v1251 = vpack.c.b16 %v1247, %v1246
        %vm1256 = vcmask 523264
        %v1258 = vsel %vm1256, %v1227, 0
        %1260 = vmatprep.subr.bf16.mxu0 0
        %1261 = vmatpush1.bf16.msra.mxu0 %v1248
        %1262 = vmatprep.subr.bf16.mxu0 0
        %1263 = vmatpush1.bf16.msra.mxu0 %v1249
        %1264 = vmatprep.subr.bf16.mxu0 0
        %1265 = vmatpush1.bf16.msra.mxu0 %v1250
        %1266 = vmatprep.subr.bf16.mxu0 0
        %1267 = vmatpush1.bf16.msra.mxu0 %v1251
        %1268 = vmatprep.subr.bf16.mxu0 0
        %1269 = vmatpush1.bf16.msra.mxu0 0
        %1270 = vmatprep.subr.bf16.mxu0 0
        %1271 = vmatpush1.bf16.msra.mxu0 0
        %1272 = vmatprep.subr.bf16.mxu0 0
        %1273 = vmatpush1.bf16.msra.mxu0 0
        %1274 = vmatprep.subr.bf16.mxu0 0
        %1275 = vmatpush1.bf16.msra.mxu0 0
        %1276 = vmatprep.subr.bf16.mxu0 0
        %1277 = vmatpush1.bf16.msra.mxu0 0
        %1278 = vmatprep.subr.bf16.mxu0 0
        %1279 = vmatpush1.bf16.msra.mxu0 0
        %1280 = vmatprep.subr.bf16.mxu0 0
        %1281 = vmatpush1.bf16.msra.mxu0 0
        %1282 = vmatprep.subr.bf16.mxu0 0
        %1283 = vmatpush1.bf16.msra.mxu0 0
        %1284 = vmatprep.subr.bf16.mxu0 0
        %1285 = vmatpush1.bf16.msra.mxu0 0
        %1286 = vmatprep.subr.bf16.mxu0 0
        %1287 = vmatpush1.bf16.msra.mxu0 0
        %1288 = vmatprep.subr.bf16.mxu0 0
        %1289 = vmatpush1.bf16.msra.mxu0 0
        %1290 = vmatprep.subr.bf16.mxu0 0
        %1291 = vmatpush1.bf16.msra.mxu0 0
        %1292 = vmatprep.mubr.bf16.mxu0 0
        %1293 = vmatmul.mubr.bf16.gmra.mrb[0].mxu0 %v1258
        %v1294 = vpop.f32.mrb[0].mxu0
        %v1295 = vadd.f32 %v1231, %v1294
        %v1296 = vpop.f32.mrb[0].mxu0
        %v1297 = vpop.f32.mrb[0].mxu0
        %v1298 = vadd.f32 %v1231, %v1297
        %v1299 = vpop.f32.mrb[0].mxu0
        %1300 = vdwg.mxu0
        %v1301 = vadd.f32 %v1158, %v1295
        %v1302 = vadd.f32 %v1159, %v1298
        %v1303 = vsel %vm364, %v1301, 0.0
        %1304 = vadd.xlane.f32.xlu0 %v1303
        %v1305 = vpop.xlane.xlu0 %1304
        %v1306 = vsel %vm364, %v1302, 0.0
        %1307 = vadd.xlane.f32.xlu0 %v1306
        %v1308 = vpop.xlane.xlu0 %1307
        %v1309 = vmul.f32 %v1305, %v1127
        %v1310 = vmul.f32 %v1308, %v1127
        %v1311 = vsub.f32 %v1301, %v1309
        %v1312 = vsub.f32 %v1302, %v1310
        %v1313 = vmul.f32 %v1311, %v1311
        %v1314 = vmul.f32 %v1312, %v1312
        %v1315 = vsel %vm364, %v1313, 0.0
        %1316 = vadd.xlane.f32.xlu0 %v1315
        %v1317 = vpop.xlane.xlu0 %1316
        %v1318 = vsel %vm364, %v1314, 0.0
        %1319 = vadd.xlane.f32.xlu0 %v1318
        %v1320 = vpop.xlane.xlu0 %1319
        %v1321 = vmul.f32 %v1317, %v1127
        %v1322 = vmul.f32 %v1320, %v1127
        %v1323 = vadd.f32 %v1321, 1e-05
        %v1324 = vadd.f32 %v1322, 1e-05
        %v1325 = vrsqrt.pop %v1323
        %v1326 = vrsqrt.pop %v1324
        %v1327 = vmul.f32 %v1311, %v1325
        %v1328 = vmul.f32 %v1312, %v1326
        %v1329 = vlaneseq
        %v1330 = vshrl.u32 %v1329, 7
        %v1331 = vsub.s32 6, %v1330
        %v1332 = vrot.slane %v422, %v1331
        %v1333 = vmul.f32 %v1327, %v1332
        %v1334 = vmul.f32 %v1328, %v1332
        %v1335 = vlaneseq
        %v1336 = vshrl.u32 %v1335, 7
        %v1337 = vsub.s32 7, %v1336
        %v1338 = vrot.slane %v422, %v1337
        %v1339 = vadd.f32 %v1333, %v1338
        %v1340 = vadd.f32 %v1334, %v1338
        %v1341 = vsel %vm364, %v1339, 0.0
        %1342 = vadd.xlane.f32.xlu0 %v1341
        %v1343 = vpop.xlane.xlu0 %1342
        %v1344 = vsel %vm364, %v1340, 0.0
        %1345 = vadd.xlane.f32.xlu0 %v1344
        %v1346 = vpop.xlane.xlu0 %1345
        %v1347 = vmul.f32 %v1343, %v1127
        %v1348 = vmul.f32 %v1346, %v1127
        %v1349 = vsub.f32 %v1339, %v1347
        %v1350 = vsub.f32 %v1340, %v1348
        %v1351 = vmul.f32 %v1349, %v1349
        %v1352 = vmul.f32 %v1350, %v1350
        %v1353 = vsel %vm364, %v1351, 0.0
        %1354 = vadd.xlane.f32.xlu0 %v1353
        %v1355 = vpop.xlane.xlu0 %1354
        %v1356 = vsel %vm364, %v1352, 0.0
        %1357 = vadd.xlane.f32.xlu0 %v1356
        %v1358 = vpop.xlane.xlu0 %1357
        %v1359 = vmul.f32 %v1355, %v1127
        %v1360 = vmul.f32 %v1358, %v1127
        %v1361 = vadd.f32 %v1359, 1e-05
        %v1362 = vadd.f32 %v1360, 1e-05
        %v1363 = vrsqrt.pop %v1361
        %v1364 = vrsqrt.pop %v1362
        %v1365 = vmul.f32 %v1349, %v1363
        %v1366 = vmul.f32 %v1350, %v1364
        %v1367 = vlaneseq
        %v1368 = vshrl.u32 %v1367, 7
        %v1369 = vsub.s32 0, %v1368
        %v1370 = vrot.slane %v423, %v1369
        %v1371 = vmul.f32 %v1365, %v1370
        %v1372 = vmul.f32 %v1366, %v1370
        %v1373 = vlaneseq
        %v1374 = vshrl.u32 %v1373, 7
        %v1375 = vsub.s32 1, %v1374
        %v1376 = vrot.slane %v423, %v1375
        %v1377 = vadd.f32 %v1371, %v1376
        %v1378 = vadd.f32 %v1372, %v1376
        %v1379 = vld [vmem:[%s5] sm:$0xf]
        %v1380 = vld [vmem:[%s5 + $0x4] sm:$0xf]
        %v1381 = vld [vmem:[%s5 + $0x8] sm:$0xf]
        %v1382 = vld [vmem:[%s5 + $0xc] sm:$0xf]
        %v1383 = vld [vmem:[%s6] sm:$0xf]
        %v1384 = vld [vmem:[%s6 + $0x4] sm:$0xf]
        %v1385 = vld [vmem:[%s6 + $0x8] sm:$0xf]
        %v1386 = vld [vmem:[%s6 + $0xc] sm:$0xf]
        %v1387 = vld [vmem:[%s6 + $0x10] sm:$0xf]
        %v1388 = vld [vmem:[%s6 + $0x14] sm:$0xf]
        %v1389 = vld [vmem:[%s6 + $0x18] sm:$0xf]
        %v1390 = vld [vmem:[%s6 + $0x1c] sm:$0xf]
        %v1391 = vld [vmem:[#allocation4] sm:$0xff]
        %v1392 = vld [vmem:[#allocation4 + $0x8] sm:$0x3]
        %v1393 = vlaneseq
        %v1394 = vshrl.u32 %v1393, 7
        %v1395 = vsub.s32 0, %v1394
        %v1396 = vrot.slane %v1391, %v1395
        %1398 = vrot.lane.b32.xlu0 %v1396, 96
        %v1399 = vpop.permute.xlu0 %1398
        %v1401 = vadd.f32 %v406, %v1399
        %v1402 = vadd.f32 %v408, %v1399
        %v1403 = vpack.c.bf16 %v1401, %v1401
        %v1404 = vpack.c.bf16 %v1402, %v1402
        %v1406 = vrot.slane %v1403, 2
        %1407 = vrot.lane.b32.xlu0 %v1406, 32
        %v1408 = vpop.permute.xlu0 %1407
        %v1410 = vrot.slane %v1404, 2
        %v1412 = vsel %vm434, %v1408, 0
        %v1415 = vsel %vm434, %v1410, 0
        %1417 = vmatprep.subr.bf16.mxu0 0
        %1418 = vmatpush1.bf16.xpose.msra.mxu0 %v1415
        %1419 = vmatprep.subr.bf16.mxu0 0
        %1420 = vmatpush1.bf16.xpose.msra.mxu0 0
        %1421 = vmatprep.subr.bf16.mxu0 0
        %1422 = vmatpush1.bf16.xpose.msra.mxu0 0
        %1423 = vmatprep.subr.bf16.mxu0 0
        %1424 = vmatpush1.bf16.xpose.msra.mxu0 0
        %1425 = vmatprep.subr.bf16.mxu0 0
        %1426 = vmatpush1.bf16.xpose.msra.mxu0 0
        %1427 = vmatprep.subr.bf16.mxu0 0
        %1428 = vmatpush1.bf16.xpose.msra.mxu0 0
        %1429 = vmatprep.subr.bf16.mxu0 0
        %1430 = vmatpush1.bf16.xpose.msra.mxu0 0
        %1431 = vmatprep.subr.bf16.mxu0 0
        %1432 = vmatpush1.bf16.xpose.msra.mxu0 0
        %1433 = vmatprep.subr.bf16.mxu0 0
        %1434 = vmatpush1.bf16.xpose.msra.mxu0 0
        %1435 = vmatprep.subr.bf16.mxu0 0
        %1436 = vmatpush1.bf16.xpose.msra.mxu0 0
        %1437 = vmatprep.subr.bf16.mxu0 0
        %1438 = vmatpush1.bf16.xpose.msra.mxu0 0
        %1439 = vmatprep.subr.bf16.mxu0 0
        %1440 = vmatpush1.bf16.xpose.msra.mxu0 0
        %1441 = vmatprep.subr.bf16.mxu0 0
        %1442 = vmatpush1.bf16.xpose.msra.mxu0 0
        %1443 = vmatprep.subr.bf16.mxu0 0
        %1444 = vmatpush1.bf16.xpose.msra.mxu0 0
        %1445 = vmatprep.subr.bf16.mxu0 0
        %1446 = vmatpush1.bf16.xpose.msra.mxu0 0
        %1447 = vmatprep.subr.bf16.mxu0 0
        %1448 = vmatpush1.bf16.xpose.msra.mxu0 0
        %1449 = vmatprep.mubr.bf16.mxu0 0
        %1450 = vmatmul.mubr.bf16.gmra.mrb[0].mxu0 %v1412
        %v1451 = vpop.f32.mrb[0].mxu0
        %v1452 = vadd.f32 0.0, %v1451
        %v1453 = vpop.f32.mrb[0].mxu0
        %v1454 = vpop.f32.mrb[0].mxu0
        %v1455 = vpop.f32.mrb[0].mxu0
        %1456 = vdwg.mxu0
        %vm1457 = vcmask 27648
        %v1458 = vsel %vm1457, %v1452, -inf
        %1459 = vmax.xlane.f32.xlu0 %v1458
        %v1460 = vpop.xlane.xlu0 %1459
        %v1461 = vsub.f32 %v1452, %v1460
        %v1462 = vmul.f32 %v1461, 1.442695
        %v1463 = vpow.pop %v1462
        %v1464 = vsel %vm1457, %v1463, 0.0
        %1465 = vadd.xlane.f32.xlu0 %v1464
        %v1466 = vpop.xlane.xlu0 %1465
        %v1467 = vrcp.pop %v1466
        %v1468 = vmul.f32 %v1463, %v1467
        %v1469 = vpack.c.bf16 %v1468, %v1468
        %1470 = vrot.lane.b32.xlu0 %v1410, 96
        %v1471 = vpop.permute.xlu0 %1470
        %vm1472 = vcmask 31744
        %v1474 = vsel %vm1472, %v1469, 0
        %vm1476 = vcmask 1041408
        %v1478 = vsel %vm1476, %v1471, 0
        %1480 = vmatprep.subr.bf16.mxu0 0
        %1481 = vmatpush1.bf16.msra.mxu0 %v1478
        %1482 = vmatprep.subr.bf16.mxu0 0
        %1483 = vmatpush1.bf16.msra.mxu0 0
        %1484 = vmatprep.subr.bf16.mxu0 0
        %1485 = vmatpush1.bf16.msra.mxu0 0
        %1486 = vmatprep.subr.bf16.mxu0 0
        %1487 = vmatpush1.bf16.msra.mxu0 0
        %1488 = vmatprep.subr.bf16.mxu0 0
        %1489 = vmatpush1.bf16.msra.mxu0 0
        %1490 = vmatprep.subr.bf16.mxu0 0
        %1491 = vmatpush1.bf16.msra.mxu0 0
        %1492 = vmatprep.subr.bf16.mxu0 0
        %1493 = vmatpush1.bf16.msra.mxu0 0
        %1494 = vmatprep.subr.bf16.mxu0 0
        %1495 = vmatpush1.bf16.msra.mxu0 0
        %1496 = vmatprep.subr.bf16.mxu0 0
        %1497 = vmatpush1.bf16.msra.mxu0 0
        %1498 = vmatprep.subr.bf16.mxu0 0
        %1499 = vmatpush1.bf16.msra.mxu0 0
        %1500 = vmatprep.subr.bf16.mxu0 0
        %1501 = vmatpush1.bf16.msra.mxu0 0
        %1502 = vmatprep.subr.bf16.mxu0 0
        %1503 = vmatpush1.bf16.msra.mxu0 0
        %1504 = vmatprep.subr.bf16.mxu0 0
        %1505 = vmatpush1.bf16.msra.mxu0 0
        %1506 = vmatprep.subr.bf16.mxu0 0
        %1507 = vmatpush1.bf16.msra.mxu0 0
        %1508 = vmatprep.subr.bf16.mxu0 0
        %1509 = vmatpush1.bf16.msra.mxu0 0
        %1510 = vmatprep.subr.bf16.mxu0 0
        %1511 = vmatpush1.bf16.msra.mxu0 0
        %1512 = vmatprep.mubr.bf16.mxu0 0
        %1513 = vmatmul.mubr.bf16.gmra.mrb[0].mxu0 %v1474
        %v1514 = vpop.f32.mrb[0].mxu0
        %v1515 = vadd.f32 0.0, %v1514
        %v1516 = vpop.f32.mrb[0].mxu0
        %v1517 = vpop.f32.mrb[0].mxu0
        %v1518 = vpop.f32.mrb[0].mxu0
        %1519 = vdwg.mxu0
        %v1520 = vpack.c.bf16 %v1515, %v1515
        %1521 = vrot.lane.b32.xlu0 %v1406, 24
        %v1522 = vpop.permute.xlu0 %1521
        %1523 = vrot.lane.b32.xlu0 %v1410, 120
        %v1524 = vpop.permute.xlu0 %1523
        %v1526 = vsel %vm434, %v1522, 0
        %v1529 = vsel %vm434, %v1524, 0
        %1531 = vmatprep.subr.bf16.mxu0 0
        %1532 = vmatpush1.bf16.xpose.msra.mxu0 %v1529
        %1533 = vmatprep.subr.bf16.mxu0 0
        %1534 = vmatpush1.bf16.xpose.msra.mxu0 0
        %1535 = vmatprep.subr.bf16.mxu0 0
        %1536 = vmatpush1.bf16.xpose.msra.mxu0 0
        %1537 = vmatprep.subr.bf16.mxu0 0
        %1538 = vmatpush1.bf16.xpose.msra.mxu0 0
        %1539 = vmatprep.subr.bf16.mxu0 0
        %1540 = vmatpush1.bf16.xpose.msra.mxu0 0
        %1541 = vmatprep.subr.bf16.mxu0 0
        %1542 = vmatpush1.bf16.xpose.msra.mxu0 0
        %1543 = vmatprep.subr.bf16.mxu0 0
        %1544 = vmatpush1.bf16.xpose.msra.mxu0 0
        %1545 = vmatprep.subr.bf16.mxu0 0
        %1546 = vmatpush1.bf16.xpose.msra.mxu0 0
        %1547 = vmatprep.subr.bf16.mxu0 0
        %1548 = vmatpush1.bf16.xpose.msra.mxu0 0
        %1549 = vmatprep.subr.bf16.mxu0 0
        %1550 = vmatpush1.bf16.xpose.msra.mxu0 0
        %1551 = vmatprep.subr.bf16.mxu0 0
        %1552 = vmatpush1.bf16.xpose.msra.mxu0 0
        %1553 = vmatprep.subr.bf16.mxu0 0
        %1554 = vmatpush1.bf16.xpose.msra.mxu0 0
        %1555 = vmatprep.subr.bf16.mxu0 0
        %1556 = vmatpush1.bf16.xpose.msra.mxu0 0
        %1557 = vmatprep.subr.bf16.mxu0 0
        %1558 = vmatpush1.bf16.xpose.msra.mxu0 0
        %1559 = vmatprep.subr.bf16.mxu0 0
        %1560 = vmatpush1.bf16.xpose.msra.mxu0 0
        %1561 = vmatprep.subr.bf16.mxu0 0
        %1562 = vmatpush1.bf16.xpose.msra.mxu0 0
        %1563 = vmatprep.mubr.bf16.mxu0 0
        %1564 = vmatmul.mubr.bf16.gmra.mrb[0].mxu0 %v1526
        %v1565 = vpop.f32.mrb[0].mxu0
        %v1566 = vadd.f32 0.0, %v1565
        %v1567 = vpop.f32.mrb[0].mxu0
        %v1568 = vpop.f32.mrb[0].mxu0
        %v1569 = vpop.f32.mrb[0].mxu0
        %1570 = vdwg.mxu0
        %v1571 = vsel %vm1457, %v1566, -inf
        %1572 = vmax.xlane.f32.xlu0 %v1571
        %v1573 = vpop.xlane.xlu0 %1572
        %v1574 = vsub.f32 %v1566, %v1573
        %v1575 = vmul.f32 %v1574, 1.442695
        %v1576 = vpow.pop %v1575
        %v1577 = vsel %vm1457, %v1576, 0.0
        %1578 = vadd.xlane.f32.xlu0 %v1577
        %v1579 = vpop.xlane.xlu0 %1578
        %v1580 = vrcp.pop %v1579
        %v1581 = vmul.f32 %v1576, %v1580
        %v1582 = vpack.c.bf16 %v1581, %v1581
        %1583 = vrot.lane.b32.xlu0 %v1410, 88
        %v1584 = vpop.permute.xlu0 %1583
        %v1586 = vsel %vm1472, %v1582, 0
        %v1589 = vsel %vm1476, %v1584, 0
        %1591 = vmatprep.subr.bf16.mxu0 0
        %1592 = vmatpush1.bf16.msra.mxu0 %v1589
        %1593 = vmatprep.subr.bf16.mxu0 0
        %1594 = vmatpush1.bf16.msra.mxu0 0
        %1595 = vmatprep.subr.bf16.mxu0 0
        %1596 = vmatpush1.bf16.msra.mxu0 0
        %1597 = vmatprep.subr.bf16.mxu0 0
        %1598 = vmatpush1.bf16.msra.mxu0 0
        %1599 = vmatprep.subr.bf16.mxu0 0
        %1600 = vmatpush1.bf16.msra.mxu0 0
        %1601 = vmatprep.subr.bf16.mxu0 0
        %1602 = vmatpush1.bf16.msra.mxu0 0
        %1603 = vmatprep.subr.bf16.mxu0 0
        %1604 = vmatpush1.bf16.msra.mxu0 0
        %1605 = vmatprep.subr.bf16.mxu0 0
        %1606 = vmatpush1.bf16.msra.mxu0 0
        %1607 = vmatprep.subr.bf16.mxu0 0
        %1608 = vmatpush1.bf16.msra.mxu0 0
        %1609 = vmatprep.subr.bf16.mxu0 0
        %1610 = vmatpush1.bf16.msra.mxu0 0
        %1611 = vmatprep.subr.bf16.mxu0 0
        %1612 = vmatpush1.bf16.msra.mxu0 0
        %1613 = vmatprep.subr.bf16.mxu0 0
        %1614 = vmatpush1.bf16.msra.mxu0 0
        %1615 = vmatprep.subr.bf16.mxu0 0
        %1616 = vmatpush1.bf16.msra.mxu0 0
        %1617 = vmatprep.subr.bf16.mxu0 0
        %1618 = vmatpush1.bf16.msra.mxu0 0
        %1619 = vmatprep.subr.bf16.mxu0 0
        %1620 = vmatpush1.bf16.msra.mxu0 0
        %1621 = vmatprep.subr.bf16.mxu0 0
        %1622 = vmatpush1.bf16.msra.mxu0 0
        %1623 = vmatprep.mubr.bf16.mxu0 0
        %1624 = vmatmul.mubr.bf16.gmra.mrb[0].mxu0 %v1586
        %v1625 = vpop.f32.mrb[0].mxu0
        %v1626 = vadd.f32 0.0, %v1625
        %v1627 = vpop.f32.mrb[0].mxu0
        %v1628 = vpop.f32.mrb[0].mxu0
        %v1629 = vpop.f32.mrb[0].mxu0
        %1630 = vdwg.mxu0
        %v1631 = vpack.c.bf16 %v1626, %v1626
        %v1633 = vsel %vm434, %v1631, 0
        %v1636 = vsel %vm679, %v1380, 0
        %1638 = vmatprep.subr.bf16.mxu0 0
        %1639 = vmatpush1.bf16.msra.mxu0 %v1636
        %1640 = vmatprep.subr.bf16.mxu0 0
        %1641 = vmatpush1.bf16.msra.mxu0 0
        %1642 = vmatprep.subr.bf16.mxu0 0
        %1643 = vmatpush1.bf16.msra.mxu0 0
        %1644 = vmatprep.subr.bf16.mxu0 0
        %1645 = vmatpush1.bf16.msra.mxu0 0
        %1646 = vmatprep.subr.bf16.mxu0 0
        %1647 = vmatpush1.bf16.msra.mxu0 0
        %1648 = vmatprep.subr.bf16.mxu0 0
        %1649 = vmatpush1.bf16.msra.mxu0 0
        %1650 = vmatprep.subr.bf16.mxu0 0
        %1651 = vmatpush1.bf16.msra.mxu0 0
        %1652 = vmatprep.subr.bf16.mxu0 0
        %1653 = vmatpush1.bf16.msra.mxu0 0
        %1654 = vmatprep.subr.bf16.mxu0 0
        %1655 = vmatpush1.bf16.msra.mxu0 0
        %1656 = vmatprep.subr.bf16.mxu0 0
        %1657 = vmatpush1.bf16.msra.mxu0 0
        %1658 = vmatprep.subr.bf16.mxu0 0
        %1659 = vmatpush1.bf16.msra.mxu0 0
        %1660 = vmatprep.subr.bf16.mxu0 0
        %1661 = vmatpush1.bf16.msra.mxu0 0
        %1662 = vmatprep.subr.bf16.mxu0 0
        %1663 = vmatpush1.bf16.msra.mxu0 0
        %1664 = vmatprep.subr.bf16.mxu0 0
        %1665 = vmatpush1.bf16.msra.mxu0 0
        %1666 = vmatprep.subr.bf16.mxu0 0
        %1667 = vmatpush1.bf16.msra.mxu0 0
        %1668 = vmatprep.subr.bf16.mxu0 0
        %1669 = vmatpush1.bf16.msra.mxu0 0
        %1670 = vmatprep.mubr.bf16.mxu0 0
        %1671 = vmatmul.mubr.bf16.gmra.mrb[0].mxu0 %v1633
        %v1672 = vpop.f32.mrb[0].mxu0
        %v1673 = vadd.f32 0.0, %v1672
        %v1674 = vpop.f32.mrb[0].mxu0
        %v1675 = vpop.f32.mrb[0].mxu0
        %v1676 = vpop.f32.mrb[0].mxu0
        %1677 = vdwg.mxu0
        %v1679 = vsel %vm434, %v1520, 0
        %v1682 = vsel %vm679, %v1379, 0
        %1684 = vmatprep.subr.bf16.mxu0 0
        %1685 = vmatpush1.bf16.msra.mxu0 %v1682
        %1686 = vmatprep.subr.bf16.mxu0 0
        %1687 = vmatpush1.bf16.msra.mxu0 0
        %1688 = vmatprep.subr.bf16.mxu0 0
        %1689 = vmatpush1.bf16.msra.mxu0 0
        %1690 = vmatprep.subr.bf16.mxu0 0
        %1691 = vmatpush1.bf16.msra.mxu0 0
        %1692 = vmatprep.subr.bf16.mxu0 0
        %1693 = vmatpush1.bf16.msra.mxu0 0
        %1694 = vmatprep.subr.bf16.mxu0 0
        %1695 = vmatpush1.bf16.msra.mxu0 0
        %1696 = vmatprep.subr.bf16.mxu0 0
        %1697 = vmatpush1.bf16.msra.mxu0 0
        %1698 = vmatprep.subr.bf16.mxu0 0
        %1699 = vmatpush1.bf16.msra.mxu0 0
        %1700 = vmatprep.subr.bf16.mxu0 0
        %1701 = vmatpush1.bf16.msra.mxu0 0
        %1702 = vmatprep.subr.bf16.mxu0 0
        %1703 = vmatpush1.bf16.msra.mxu0 0
        %1704 = vmatprep.subr.bf16.mxu0 0
        %1705 = vmatpush1.bf16.msra.mxu0 0
        %1706 = vmatprep.subr.bf16.mxu0 0
        %1707 = vmatpush1.bf16.msra.mxu0 0
        %1708 = vmatprep.subr.bf16.mxu0 0
        %1709 = vmatpush1.bf16.msra.mxu0 0
        %1710 = vmatprep.subr.bf16.mxu0 0
        %1711 = vmatpush1.bf16.msra.mxu0 0
        %1712 = vmatprep.subr.bf16.mxu0 0
        %1713 = vmatpush1.bf16.msra.mxu0 0
        %1714 = vmatprep.subr.bf16.mxu0 0
        %1715 = vmatpush1.bf16.msra.mxu0 0
        %1716 = vmatprep.mubr.bf16.mxu0 0
        %1717 = vmatmul.mubr.bf16.gmra.mrb[0].mxu0 %v1679
        %v1718 = vpop.f32.mrb[0].mxu0
        %v1719 = vadd.f32 %v1673, %v1718
        %v1720 = vpop.f32.mrb[0].mxu0
        %v1721 = vpop.f32.mrb[0].mxu0
        %v1722 = vpop.f32.mrb[0].mxu0
        %1723 = vdwg.mxu0
        %1724 = vrot.lane.b32.xlu0 %v1406, 16
        %v1725 = vpop.permute.xlu0 %1724
        %1726 = vrot.lane.b32.xlu0 %v1410, 112
        %v1727 = vpop.permute.xlu0 %1726
        %v1729 = vsel %vm434, %v1725, 0
        %v1732 = vsel %vm434, %v1727, 0
        %1734 = vmatprep.subr.bf16.mxu0 0
        %1735 = vmatpush1.bf16.xpose.msra.mxu0 %v1732
        %1736 = vmatprep.subr.bf16.mxu0 0
        %1737 = vmatpush1.bf16.xpose.msra.mxu0 0
        %1738 = vmatprep.subr.bf16.mxu0 0
        %1739 = vmatpush1.bf16.xpose.msra.mxu0 0
        %1740 = vmatprep.subr.bf16.mxu0 0
        %1741 = vmatpush1.bf16.xpose.msra.mxu0 0
        %1742 = vmatprep.subr.bf16.mxu0 0
        %1743 = vmatpush1.bf16.xpose.msra.mxu0 0
        %1744 = vmatprep.subr.bf16.mxu0 0
        %1745 = vmatpush1.bf16.xpose.msra.mxu0 0
        %1746 = vmatprep.subr.bf16.mxu0 0
        %1747 = vmatpush1.bf16.xpose.msra.mxu0 0
        %1748 = vmatprep.subr.bf16.mxu0 0
        %1749 = vmatpush1.bf16.xpose.msra.mxu0 0
        %1750 = vmatprep.subr.bf16.mxu0 0
        %1751 = vmatpush1.bf16.xpose.msra.mxu0 0
        %1752 = vmatprep.subr.bf16.mxu0 0
        %1753 = vmatpush1.bf16.xpose.msra.mxu0 0
        %1754 = vmatprep.subr.bf16.mxu0 0
        %1755 = vmatpush1.bf16.xpose.msra.mxu0 0
        %1756 = vmatprep.subr.bf16.mxu0 0
        %1757 = vmatpush1.bf16.xpose.msra.mxu0 0
        %1758 = vmatprep.subr.bf16.mxu0 0
        %1759 = vmatpush1.bf16.xpose.msra.mxu0 0
        %1760 = vmatprep.subr.bf16.mxu0 0
        %1761 = vmatpush1.bf16.xpose.msra.mxu0 0
        %1762 = vmatprep.subr.bf16.mxu0 0
        %1763 = vmatpush1.bf16.xpose.msra.mxu0 0
        %1764 = vmatprep.subr.bf16.mxu0 0
        %1765 = vmatpush1.bf16.xpose.msra.mxu0 0
        %1766 = vmatprep.mubr.bf16.mxu0 0
        %1767 = vmatmul.mubr.bf16.gmra.mrb[0].mxu0 %v1729
        %v1768 = vpop.f32.mrb[0].mxu0
        %v1769 = vadd.f32 0.0, %v1768
        %v1770 = vpop.f32.mrb[0].mxu0
        %v1771 = vpop.f32.mrb[0].mxu0
        %v1772 = vpop.f32.mrb[0].mxu0
        %1773 = vdwg.mxu0
        %v1774 = vsel %vm1457, %v1769, -inf
        %1775 = vmax.xlane.f32.xlu0 %v1774
        %v1776 = vpop.xlane.xlu0 %1775
        %v1777 = vsub.f32 %v1769, %v1776
        %v1778 = vmul.f32 %v1777, 1.442695
        %v1779 = vpow.pop %v1778
        %v1780 = vsel %vm1457, %v1779, 0.0
        %1781 = vadd.xlane.f32.xlu0 %v1780
        %v1782 = vpop.xlane.xlu0 %1781
        %v1783 = vrcp.pop %v1782
        %v1784 = vmul.f32 %v1779, %v1783
        %v1785 = vpack.c.bf16 %v1784, %v1784
        %1786 = vrot.lane.b32.xlu0 %v1410, 80
        %v1787 = vpop.permute.xlu0 %1786
        %v1789 = vsel %vm1472, %v1785, 0
        %v1792 = vsel %vm1476, %v1787, 0
        %1794 = vmatprep.subr.bf16.mxu0 0
        %1795 = vmatpush1.bf16.msra.mxu0 %v1792
        %1796 = vmatprep.subr.bf16.mxu0 0
        %1797 = vmatpush1.bf16.msra.mxu0 0
        %1798 = vmatprep.subr.bf16.mxu0 0
        %1799 = vmatpush1.bf16.msra.mxu0 0
        %1800 = vmatprep.subr.bf16.mxu0 0
        %1801 = vmatpush1.bf16.msra.mxu0 0
        %1802 = vmatprep.subr.bf16.mxu0 0
        %1803 = vmatpush1.bf16.msra.mxu0 0
        %1804 = vmatprep.subr.bf16.mxu0 0
        %1805 = vmatpush1.bf16.msra.mxu0 0
        %1806 = vmatprep.subr.bf16.mxu0 0
        %1807 = vmatpush1.bf16.msra.mxu0 0
        %1808 = vmatprep.subr.bf16.mxu0 0
        %1809 = vmatpush1.bf16.msra.mxu0 0
        %1810 = vmatprep.subr.bf16.mxu0 0
        %1811 = vmatpush1.bf16.msra.mxu0 0
        %1812 = vmatprep.subr.bf16.mxu0 0
        %1813 = vmatpush1.bf16.msra.mxu0 0
        %1814 = vmatprep.subr.bf16.mxu0 0
        %1815 = vmatpush1.bf16.msra.mxu0 0
        %1816 = vmatprep.subr.bf16.mxu0 0
        %1817 = vmatpush1.bf16.msra.mxu0 0
        %1818 = vmatprep.subr.bf16.mxu0 0
        %1819 = vmatpush1.bf16.msra.mxu0 0
        %1820 = vmatprep.subr.bf16.mxu0 0
        %1821 = vmatpush1.bf16.msra.mxu0 0
        %1822 = vmatprep.subr.bf16.mxu0 0
        %1823 = vmatpush1.bf16.msra.mxu0 0
        %1824 = vmatprep.subr.bf16.mxu0 0
        %1825 = vmatpush1.bf16.msra.mxu0 0
        %1826 = vmatprep.mubr.bf16.mxu0 0
        %1827 = vmatmul.mubr.bf16.gmra.mrb[0].mxu0 %v1789
        %v1828 = vpop.f32.mrb[0].mxu0
        %v1829 = vadd.f32 0.0, %v1828
        %v1830 = vpop.f32.mrb[0].mxu0
        %v1831 = vpop.f32.mrb[0].mxu0
        %v1832 = vpop.f32.mrb[0].mxu0
        %1833 = vdwg.mxu0
        %v1834 = vpack.c.bf16 %v1829, %v1829
        %v1836 = vsel %vm434, %v1834, 0
        %v1839 = vsel %vm679, %v1381, 0
        %1841 = vmatprep.subr.bf16.mxu0 0
        %1842 = vmatpush1.bf16.msra.mxu0 %v1839
        %1843 = vmatprep.subr.bf16.mxu0 0
        %1844 = vmatpush1.bf16.msra.mxu0 0
        %1845 = vmatprep.subr.bf16.mxu0 0
        %1846 = vmatpush1.bf16.msra.mxu0 0
        %1847 = vmatprep.subr.bf16.mxu0 0
        %1848 = vmatpush1.bf16.msra.mxu0 0
        %1849 = vmatprep.subr.bf16.mxu0 0
        %1850 = vmatpush1.bf16.msra.mxu0 0
        %1851 = vmatprep.subr.bf16.mxu0 0
        %1852 = vmatpush1.bf16.msra.mxu0 0
        %1853 = vmatprep.subr.bf16.mxu0 0
        %1854 = vmatpush1.bf16.msra.mxu0 0
        %1855 = vmatprep.subr.bf16.mxu0 0
        %1856 = vmatpush1.bf16.msra.mxu0 0
        %1857 = vmatprep.subr.bf16.mxu0 0
        %1858 = vmatpush1.bf16.msra.mxu0 0
        %1859 = vmatprep.subr.bf16.mxu0 0
        %1860 = vmatpush1.bf16.msra.mxu0 0
        %1861 = vmatprep.subr.bf16.mxu0 0
        %1862 = vmatpush1.bf16.msra.mxu0 0
        %1863 = vmatprep.subr.bf16.mxu0 0
        %1864 = vmatpush1.bf16.msra.mxu0 0
        %1865 = vmatprep.subr.bf16.mxu0 0
        %1866 = vmatpush1.bf16.msra.mxu0 0
        %1867 = vmatprep.subr.bf16.mxu0 0
        %1868 = vmatpush1.bf16.msra.mxu0 0
        %1869 = vmatprep.subr.bf16.mxu0 0
        %1870 = vmatpush1.bf16.msra.mxu0 0
        %1871 = vmatprep.subr.bf16.mxu0 0
        %1872 = vmatpush1.bf16.msra.mxu0 0
        %1873 = vmatprep.mubr.bf16.mxu0 0
        %1874 = vmatmul.mubr.bf16.gmra.mrb[0].mxu0 %v1836
        %v1875 = vpop.f32.mrb[0].mxu0
        %v1876 = vadd.f32 0.0, %v1875
        %v1877 = vpop.f32.mrb[0].mxu0
        %v1878 = vpop.f32.mrb[0].mxu0
        %v1879 = vpop.f32.mrb[0].mxu0
        %1880 = vdwg.mxu0
        %v1881 = vadd.f32 %v1719, %v1876
        %1882 = vrot.lane.b32.xlu0 %v1406, 8
        %v1883 = vpop.permute.xlu0 %1882
        %1884 = vrot.lane.b32.xlu0 %v1410, 104
        %v1885 = vpop.permute.xlu0 %1884
        %v1887 = vsel %vm434, %v1883, 0
        %v1890 = vsel %vm434, %v1885, 0
        %1892 = vmatprep.subr.bf16.mxu0 0
        %1893 = vmatpush1.bf16.xpose.msra.mxu0 %v1890
        %1894 = vmatprep.subr.bf16.mxu0 0
        %1895 = vmatpush1.bf16.xpose.msra.mxu0 0
        %1896 = vmatprep.subr.bf16.mxu0 0
        %1897 = vmatpush1.bf16.xpose.msra.mxu0 0
        %1898 = vmatprep.subr.bf16.mxu0 0
        %1899 = vmatpush1.bf16.xpose.msra.mxu0 0
        %1900 = vmatprep.subr.bf16.mxu0 0
        %1901 = vmatpush1.bf16.xpose.msra.mxu0 0
        %1902 = vmatprep.subr.bf16.mxu0 0
        %1903 = vmatpush1.bf16.xpose.msra.mxu0 0
        %1904 = vmatprep.subr.bf16.mxu0 0
        %1905 = vmatpush1.bf16.xpose.msra.mxu0 0
        %1906 = vmatprep.subr.bf16.mxu0 0
        %1907 = vmatpush1.bf16.xpose.msra.mxu0 0
        %1908 = vmatprep.subr.bf16.mxu0 0
        %1909 = vmatpush1.bf16.xpose.msra.mxu0 0
        %1910 = vmatprep.subr.bf16.mxu0 0
        %1911 = vmatpush1.bf16.xpose.msra.mxu0 0
        %1912 = vmatprep.subr.bf16.mxu0 0
        %1913 = vmatpush1.bf16.xpose.msra.mxu0 0
        %1914 = vmatprep.subr.bf16.mxu0 0
        %1915 = vmatpush1.bf16.xpose.msra.mxu0 0
        %1916 = vmatprep.subr.bf16.mxu0 0
        %1917 = vmatpush1.bf16.xpose.msra.mxu0 0
        %1918 = vmatprep.subr.bf16.mxu0 0
        %1919 = vmatpush1.bf16.xpose.msra.mxu0 0
        %1920 = vmatprep.subr.bf16.mxu0 0
        %1921 = vmatpush1.bf16.xpose.msra.mxu0 0
        %1922 = vmatprep.subr.bf16.mxu0 0
        %1923 = vmatpush1.bf16.xpose.msra.mxu0 0
        %1924 = vmatprep.mubr.bf16.mxu0 0
        %1925 = vmatmul.mubr.bf16.gmra.mrb[0].mxu0 %v1887
        %v1926 = vpop.f32.mrb[0].mxu0
        %v1927 = vadd.f32 0.0, %v1926
        %v1928 = vpop.f32.mrb[0].mxu0
        %v1929 = vpop.f32.mrb[0].mxu0
        %v1930 = vpop.f32.mrb[0].mxu0
        %1931 = vdwg.mxu0
        %v1932 = vsel %vm1457, %v1927, -inf
        %1933 = vmax.xlane.f32.xlu0 %v1932
        %v1934 = vpop.xlane.xlu0 %1933
        %v1935 = vsub.f32 %v1927, %v1934
        %v1936 = vmul.f32 %v1935, 1.442695
        %v1937 = vpow.pop %v1936
        %v1938 = vsel %vm1457, %v1937, 0.0
        %1939 = vadd.xlane.f32.xlu0 %v1938
        %v1940 = vpop.xlane.xlu0 %1939
        %v1941 = vrcp.pop %v1940
        %v1942 = vmul.f32 %v1937, %v1941
        %v1943 = vpack.c.bf16 %v1942, %v1942
        %1944 = vrot.lane.b32.xlu0 %v1410, 72
        %v1945 = vpop.permute.xlu0 %1944
        %v1947 = vsel %vm1472, %v1943, 0
        %v1950 = vsel %vm1476, %v1945, 0
        %1952 = vmatprep.subr.bf16.mxu0 0
        %1953 = vmatpush1.bf16.msra.mxu0 %v1950
        %1954 = vmatprep.subr.bf16.mxu0 0
        %1955 = vmatpush1.bf16.msra.mxu0 0
        %1956 = vmatprep.subr.bf16.mxu0 0
        %1957 = vmatpush1.bf16.msra.mxu0 0
        %1958 = vmatprep.subr.bf16.mxu0 0
        %1959 = vmatpush1.bf16.msra.mxu0 0
        %1960 = vmatprep.subr.bf16.mxu0 0
        %1961 = vmatpush1.bf16.msra.mxu0 0
        %1962 = vmatprep.subr.bf16.mxu0 0
        %1963 = vmatpush1.bf16.msra.mxu0 0
        %1964 = vmatprep.subr.bf16.mxu0 0
        %1965 = vmatpush1.bf16.msra.mxu0 0
        %1966 = vmatprep.subr.bf16.mxu0 0
        %1967 = vmatpush1.bf16.msra.mxu0 0
        %1968 = vmatprep.subr.bf16.mxu0 0
        %1969 = vmatpush1.bf16.msra.mxu0 0
        %1970 = vmatprep.subr.bf16.mxu0 0
        %1971 = vmatpush1.bf16.msra.mxu0 0
        %1972 = vmatprep.subr.bf16.mxu0 0
        %1973 = vmatpush1.bf16.msra.mxu0 0
        %1974 = vmatprep.subr.bf16.mxu0 0
        %1975 = vmatpush1.bf16.msra.mxu0 0
        %1976 = vmatprep.subr.bf16.mxu0 0
        %1977 = vmatpush1.bf16.msra.mxu0 0
        %1978 = vmatprep.subr.bf16.mxu0 0
        %1979 = vmatpush1.bf16.msra.mxu0 0
        %1980 = vmatprep.subr.bf16.mxu0 0
        %1981 = vmatpush1.bf16.msra.mxu0 0
        %1982 = vmatprep.subr.bf16.mxu0 0
        %1983 = vmatpush1.bf16.msra.mxu0 0
        %1984 = vmatprep.mubr.bf16.mxu0 0
        %1985 = vmatmul.mubr.bf16.gmra.mrb[0].mxu0 %v1947
        %v1986 = vpop.f32.mrb[0].mxu0
        %v1987 = vadd.f32 0.0, %v1986
        %v1988 = vpop.f32.mrb[0].mxu0
        %v1989 = vpop.f32.mrb[0].mxu0
        %v1990 = vpop.f32.mrb[0].mxu0
        %1991 = vdwg.mxu0
        %v1992 = vpack.c.bf16 %v1987, %v1987
        %v1994 = vsel %vm434, %v1992, 0
        %v1997 = vsel %vm679, %v1382, 0
        %1999 = vmatprep.subr.bf16.mxu0 0
        %2000 = vmatpush1.bf16.msra.mxu0 %v1997
        %2001 = vmatprep.subr.bf16.mxu0 0
        %2002 = vmatpush1.bf16.msra.mxu0 0
        %2003 = vmatprep.subr.bf16.mxu0 0
        %2004 = vmatpush1.bf16.msra.mxu0 0
        %2005 = vmatprep.subr.bf16.mxu0 0
        %2006 = vmatpush1.bf16.msra.mxu0 0
        %2007 = vmatprep.subr.bf16.mxu0 0
        %2008 = vmatpush1.bf16.msra.mxu0 0
        %2009 = vmatprep.subr.bf16.mxu0 0
        %2010 = vmatpush1.bf16.msra.mxu0 0
        %2011 = vmatprep.subr.bf16.mxu0 0
        %2012 = vmatpush1.bf16.msra.mxu0 0
        %2013 = vmatprep.subr.bf16.mxu0 0
        %2014 = vmatpush1.bf16.msra.mxu0 0
        %2015 = vmatprep.subr.bf16.mxu0 0
        %2016 = vmatpush1.bf16.msra.mxu0 0
        %2017 = vmatprep.subr.bf16.mxu0 0
        %2018 = vmatpush1.bf16.msra.mxu0 0
        %2019 = vmatprep.subr.bf16.mxu0 0
        %2020 = vmatpush1.bf16.msra.mxu0 0
        %2021 = vmatprep.subr.bf16.mxu0 0
        %2022 = vmatpush1.bf16.msra.mxu0 0
        %2023 = vmatprep.subr.bf16.mxu0 0
        %2024 = vmatpush1.bf16.msra.mxu0 0
        %2025 = vmatprep.subr.bf16.mxu0 0
        %2026 = vmatpush1.bf16.msra.mxu0 0
        %2027 = vmatprep.subr.bf16.mxu0 0
        %2028 = vmatpush1.bf16.msra.mxu0 0
        %2029 = vmatprep.subr.bf16.mxu0 0
        %2030 = vmatpush1.bf16.msra.mxu0 0
        %2031 = vmatprep.mubr.bf16.mxu0 0
        %2032 = vmatmul.mubr.bf16.gmra.mrb[0].mxu0 %v1994
        %v2033 = vpop.f32.mrb[0].mxu0
        %v2034 = vadd.f32 0.0, %v2033
        %v2035 = vpop.f32.mrb[0].mxu0
        %v2036 = vpop.f32.mrb[0].mxu0
        %v2037 = vpop.f32.mrb[0].mxu0
        %2038 = vdwg.mxu0
        %v2039 = vadd.f32 %v1881, %v2034
        %v2040 = vlaneseq
        %v2041 = vshrl.u32 %v2040, 7
        %v2042 = vsub.s32 1, %v2041
        %v2043 = vrot.slane %v1391, %v2042
        %v2044 = vadd.f32 %v2039, %v2043
        %v2046 = vrot.slane %v2044, 4
        %v2048 = vadd.f32 %v338, %v2046
        %vm2049 = vcmask 261124
        %v2050 = vsel %vm2049, %v2048, 0.0
        %2051 = vadd.xlane.f32.xlu0 %v2050
        %v2052 = vpop.xlane.xlu0 %2051
        %v2053 = vmul.f32 %v2052, %v1127
        %v2054 = vsub.f32 %v2048, %v2053
        %v2055 = vmul.f32 %v2054, %v2054
        %v2056 = vsel %vm2049, %v2055, 0.0
        %2057 = vadd.xlane.f32.xlu0 %v2056
        %v2058 = vpop.xlane.xlu0 %2057
        %v2059 = vmul.f32 %v2058, %v1127
        %v2060 = vadd.f32 %v2059, 1e-05
        %v2061 = vrsqrt.pop %v2060
        %v2062 = vmul.f32 %v2054, %v2061
        %v2063 = vlaneseq
        %v2064 = vshrl.u32 %v2063, 7
        %v2065 = vsub.s32 4, %v2064
        %v2066 = vrot.slane %v1391, %v2065
        %v2067 = vmul.f32 %v2062, %v2066
        %v2068 = vlaneseq
        %v2069 = vshrl.u32 %v2068, 7
        %v2070 = vsub.s32 5, %v2069
        %v2071 = vrot.slane %v1391, %v2070
        %v2072 = vadd.f32 %v2067, %v2071
        %v2073 = vpack.c.bf16 %v2072, %v2072
        %v2074 = vlaneseq
        %v2075 = vshrl.u32 %v2074, 7
        %v2076 = vsub.s32 2, %v2075
        %v2077 = vrot.slane %v1391, %v2076
        %v2079 = vrot.slane %v2073, 2
        %v2084 = vunpack.c.l.b16 %v1379
        %v2085 = vunpack.c.l.b16 %v1380
        %v2086 = vunpack.c.l.b16 %v1381
        %v2087 = vunpack.c.l.b16 %v1382
        %v2088 = vpack.c.b16 %v2085, %v2084
        %v2089 = vpack.c.b16 %v2087, %v2086
        %2090 = vrot.lane.b32.xlu0 %v2088, 96
        %v2091 = vpop.permute.xlu0 %2090
        %2092 = vrot.lane.b32.xlu0 %v2089, 96
        %v2093 = vpop.permute.xlu0 %2092
        %v2097 = vsel %vm364, %v2079, 0
        %2099 = vmatprep.subr.bf16.mxu0 0
        %2100 = vmatpush1.bf16.msra.mxu0 %v2091
        %2101 = vmatprep.subr.bf16.mxu0 0
        %2102 = vmatpush1.bf16.msra.mxu0 %v2093
        %2103 = vmatprep.subr.bf16.mxu0 0
        %2104 = vmatpush1.bf16.msra.mxu0 0
        %2105 = vmatprep.subr.bf16.mxu0 0
        %2106 = vmatpush1.bf16.msra.mxu0 0
        %2107 = vmatprep.subr.bf16.mxu0 0
        %2108 = vmatpush1.bf16.msra.mxu0 0
        %2109 = vmatprep.subr.bf16.mxu0 0
        %2110 = vmatpush1.bf16.msra.mxu0 0
        %2111 = vmatprep.subr.bf16.mxu0 0
        %2112 = vmatpush1.bf16.msra.mxu0 0
        %2113 = vmatprep.subr.bf16.mxu0 0
        %2114 = vmatpush1.bf16.msra.mxu0 0
        %2115 = vmatprep.subr.bf16.mxu0 0
        %2116 = vmatpush1.bf16.msra.mxu0 0
        %2117 = vmatprep.subr.bf16.mxu0 0
        %2118 = vmatpush1.bf16.msra.mxu0 0
        %2119 = vmatprep.subr.bf16.mxu0 0
        %2120 = vmatpush1.bf16.msra.mxu0 0
        %2121 = vmatprep.subr.bf16.mxu0 0
        %2122 = vmatpush1.bf16.msra.mxu0 0
        %2123 = vmatprep.subr.bf16.mxu0 0
        %2124 = vmatpush1.bf16.msra.mxu0 0
        %2125 = vmatprep.subr.bf16.mxu0 0
        %2126 = vmatpush1.bf16.msra.mxu0 0
        %2127 = vmatprep.subr.bf16.mxu0 0
        %2128 = vmatpush1.bf16.msra.mxu0 0
        %2129 = vmatprep.subr.bf16.mxu0 0
        %2130 = vmatpush1.bf16.msra.mxu0 0
        %2131 = vmatprep.mubr.bf16.mxu0 0
        %2132 = vmatmul.mubr.bf16.gmra.mrb[0].mxu0 %v2097
        %v2133 = vpop.f32.mrb[0].mxu0
        %v2134 = vadd.f32 %v2077, %v2133
        %v2135 = vpop.f32.mrb[0].mxu0
        %v2136 = vpop.f32.mrb[0].mxu0
        %v2137 = vpop.f32.mrb[0].mxu0
        %2138 = vdwg.mxu0
        %v2139 = vmax.f32 %v2134, 0.0
        %v2140 = vpack.c.bf16 %v2139, %v2139
        %v2141 = vlaneseq
        %v2142 = vshrl.u32 %v2141, 7
        %v2143 = vsub.s32 3, %v2142
        %v2144 = vrot.slane %v1391, %v2143
        %v2153 = vunpack.c.l.b16 %v1383
        %v2154 = vunpack.c.l.b16 %v1384
        %v2155 = vunpack.c.l.b16 %v1385
        %v2156 = vunpack.c.l.b16 %v1386
        %v2157 = vunpack.c.l.b16 %v1387
        %v2158 = vunpack.c.l.b16 %v1388
        %v2159 = vunpack.c.l.b16 %v1389
        %v2160 = vunpack.c.l.b16 %v1390
        %v2161 = vpack.c.b16 %v2154, %v2153
        %v2162 = vpack.c.b16 %v2156, %v2155
        %v2163 = vpack.c.b16 %v2158, %v2157
        %v2164 = vpack.c.b16 %v2160, %v2159
        %v2170 = vsel %vm1256, %v2140, 0
        %2172 = vmatprep.subr.bf16.mxu0 0
        %2173 = vmatpush1.bf16.msra.mxu0 %v2161
        %2174 = vmatprep.subr.bf16.mxu0 0
        %2175 = vmatpush1.bf16.msra.mxu0 %v2162
        %2176 = vmatprep.subr.bf16.mxu0 0
        %2177 = vmatpush1.bf16.msra.mxu0 %v2163
        %2178 = vmatprep.subr.bf16.mxu0 0
        %2179 = vmatpush1.bf16.msra.mxu0 %v2164
        %2180 = vmatprep.subr.bf16.mxu0 0
        %2181 = vmatpush1.bf16.msra.mxu0 0
        %2182 = vmatprep.subr.bf16.mxu0 0
        %2183 = vmatpush1.bf16.msra.mxu0 0
        %2184 = vmatprep.subr.bf16.mxu0 0
        %2185 = vmatpush1.bf16.msra.mxu0 0
        %2186 = vmatprep.subr.bf16.mxu0 0
        %2187 = vmatpush1.bf16.msra.mxu0 0
        %2188 = vmatprep.subr.bf16.mxu0 0
        %2189 = vmatpush1.bf16.msra.mxu0 0
        %2190 = vmatprep.subr.bf16.mxu0 0
        %2191 = vmatpush1.bf16.msra.mxu0 0
        %2192 = vmatprep.subr.bf16.mxu0 0
        %2193 = vmatpush1.bf16.msra.mxu0 0
        %2194 = vmatprep.subr.bf16.mxu0 0
        %2195 = vmatpush1.bf16.msra.mxu0 0
        %2196 = vmatprep.subr.bf16.mxu0 0
        %2197 = vmatpush1.bf16.msra.mxu0 0
        %2198 = vmatprep.subr.bf16.mxu0 0
        %2199 = vmatpush1.bf16.msra.mxu0 0
        %2200 = vmatprep.subr.bf16.mxu0 0
        %2201 = vmatpush1.bf16.msra.mxu0 0
        %2202 = vmatprep.subr.bf16.mxu0 0
        %2203 = vmatpush1.bf16.msra.mxu0 0
        %2204 = vmatprep.mubr.bf16.mxu0 0
        %2205 = vmatmul.mubr.bf16.gmra.mrb[0].mxu0 %v2170
        %v2206 = vpop.f32.mrb[0].mxu0
        %v2207 = vadd.f32 %v2144, %v2206
        %v2208 = vpop.f32.mrb[0].mxu0
        %v2209 = vpop.f32.mrb[0].mxu0
        %v2210 = vpop.f32.mrb[0].mxu0
        %2211 = vdwg.mxu0
        %v2213 = vrot.slane %v2207, 4
        %v2215 = vadd.f32 %v2072, %v2213
        %v2216 = vsel %vm2049, %v2215, 0.0
        %2217 = vadd.xlane.f32.xlu0 %v2216
        %v2218 = vpop.xlane.xlu0 %2217
        %v2219 = vmul.f32 %v2218, %v1127
        %v2220 = vsub.f32 %v2215, %v2219
        %v2221 = vmul.f32 %v2220, %v2220
        %v2222 = vsel %vm2049, %v2221, 0.0
        %2223 = vadd.xlane.f32.xlu0 %v2222
        %v2224 = vpop.xlane.xlu0 %2223
        %v2225 = vmul.f32 %v2224, %v1127
        %v2226 = vadd.f32 %v2225, 1e-05
        %v2227 = vrsqrt.pop %v2226
        %v2228 = vmul.f32 %v2220, %v2227
        %v2229 = vlaneseq
        %v2230 = vshrl.u32 %v2229, 7
        %v2231 = vsub.s32 6, %v2230
        %v2232 = vrot.slane %v1391, %v2231
        %v2233 = vmul.f32 %v2228, %v2232
        %v2234 = vlaneseq
        %v2235 = vshrl.u32 %v2234, 7
        %v2236 = vsub.s32 7, %v2235
        %v2237 = vrot.slane %v1391, %v2236
        %v2238 = vadd.f32 %v2233, %v2237
        %v2239 = vsel %vm2049, %v2238, 0.0
        %2240 = vadd.xlane.f32.xlu0 %v2239
        %v2241 = vpop.xlane.xlu0 %2240
        %v2242 = vmul.f32 %v2241, %v1127
        %v2243 = vsub.f32 %v2238, %v2242
        %v2244 = vmul.f32 %v2243, %v2243
        %v2245 = vsel %vm2049, %v2244, 0.0
        %2246 = vadd.xlane.f32.xlu0 %v2245
        %v2247 = vpop.xlane.xlu0 %2246
        %v2248 = vmul.f32 %v2247, %v1127
        %v2249 = vadd.f32 %v2248, 1e-05
        %v2250 = vrsqrt.pop %v2249
        %v2251 = vmul.f32 %v2243, %v2250
        %v2252 = vlaneseq
        %v2253 = vshrl.u32 %v2252, 7
        %v2254 = vsub.s32 0, %v2253
        %v2255 = vrot.slane %v1392, %v2254
        %v2256 = vmul.f32 %v2251, %v2255
        %v2257 = vlaneseq
        %v2258 = vshrl.u32 %v2257, 7
        %v2259 = vsub.s32 1, %v2258
        %v2260 = vrot.slane %v1392, %v2259
        %v2261 = vadd.f32 %v2256, %v2260
        %2262 = vst.msk [vmem:[%s335] sm:$0xff] %vm364, %v1377
        %2263 = vst.msk [vmem:[%s335 + $0x8] sm:$0xff] %vm364, %v1378
        %2264 = vst.msk [vmem:[%s335 + $0xc] sm:$0xf0] %vm2049, %v2261
        %p2265 = scmp.lt.s32.totalorder %s21, 1
        %s2266 = scalar_select %p2265, %s21, 1
        %s2267 = smul.addr %s2266, 3
        %s2268 = smul.addr %s2267, 8
        %s2269 = scalar_lea.vmem %s8, %s2268
        // Predicated region
        $region61: #{tpu_custom_call.1} parent=51 // pred_check
          %p2270 = pneg %p212
        $region62: #{tpu_custom_call.1} parent=51 // pred_check_branch
          %2272 = sbr.rel (%p2270) target = $region64
        $region63: #{tpu_custom_call.1} parent=51 // pred_region
          _
        $region64: #{tpu_custom_call.1} parent=51 // pred_fallthru
          _
      $region52: #{tpu_custom_call.1} parent=5 // pred_fallthru
        _
      %p2273 = scmp.le.s32.totalorder 2, %s16
      // Predicated region
      $region65: #{tpu_custom_call.1} parent=5 // pred_check
        %p2274 = pneg %p2273
      $region66: #{tpu_custom_call.1} parent=5 // pred_check_branch
        %2276 = sbr.rel (%p2274) target = $region68
      $region67: #{tpu_custom_call.1} parent=5 // pred_region
        %s2277 = ssub.s32 %s16, 2
        // Predicated region
        $region69: #{tpu_custom_call.1} parent=67 // pred_check
          %p2278 = pneg %p218
        $region70: #{tpu_custom_call.1} parent=67 // pred_check_branch
          %2280 = sbr.rel (%p2278) target = $region72
        $region71: #{tpu_custom_call.1} parent=67 // pred_region
          %p2281 = scmp.lt.s32.totalorder %s22, 1
          %s2282 = scalar_select %p2281, %s22, 1
          %s2283 = smul.addr %s2282, 3
          %s2284 = smul.addr %s2283, 8
          %s2285 = scalar_lea.vmem %s8, %s2284
        $region72: #{tpu_custom_call.1} parent=67 // pred_fallthru
          _
      $region68: #{tpu_custom_call.1} parent=5 // pred_fallthru
        _
    $region6: #{tpu_custom_call.1} parent=1 // loop_footer
      %s20 = sadd.s32 1, %s16
    $region7: #{tpu_custom_call.1} parent=1 // loop_footer_branch
      %15 = sbr.rel target = $region3
    $region8: #{tpu_custom_call.1} parent=1 // loop_exit
      _
    %2286 = vsyncpa [#allocation3], 1
    %s2287 = scalar_lea.sflag [#allocation3], 1
    %2288 = vsyncpa %s2287, 1
    %2289 = vsyncpa [#allocation5], 1

</llo_original>
